<compile_context>
chip_gen: v5e
topology: v5e:2x2
jax: 0.10.0
libtpu: 0.0.40
codegen_flags: <defaults>
</compile_context>

<pallas_src>
import functools
import math

import jax
import jax.numpy as jnp
from jax import lax
from jax.experimental import pallas as pl

# ---------------- small DBRX-like config ----------------
D_MODEL = 32
N_HEADS = 4
HEAD_DIM = D_MODEL // N_HEADS            # 8
KV_N_HEADS = 2
CLIP_QKV = 8.0
ROPE_THETA = 10000.0
NUM_EXPERTS = 4
TOP_K = 2
FFN_HIDDEN = 64
LN_EPS = 1e-5


def _full_spec(shape):
    n = len(shape)
    return pl.BlockSpec(shape, lambda: (0,) * n)


def _layernorm_f32(x, g, b, eps):
    mean = jnp.mean(x, axis=-1, keepdims=True)
    xc = x - mean
    var = jnp.mean(xc * xc, axis=-1, keepdims=True)
    return xc * lax.rsqrt(var + eps) * g + b


# ---------------- fused DbrxBlock kernel ----------------
def dbrx_block_kernel(
        x_ref, ln1g_ref, ln1b_ref, ln2g_ref, ln2b_ref,
        wq_ref, wk_ref, wv_ref, wout_ref, wrt_ref,
        w1_ref, v1_ref, w2_ref,
        cos_ref, sin_ref, rot_ref, bias_ref,
        o_ref, *,
        n_heads, kv_heads, n_experts, top_k, clip_qkv, eps, scale):
    f32 = jnp.float32
    bf16 = jnp.bfloat16

    x = x_ref[...].astype(f32)                           # (T, D)
    T, D = x.shape

    # ---------- norm_1 ----------
    h1 = _layernorm_f32(x, ln1g_ref[...], ln1b_ref[...], eps)
    h1b = h1.astype(bf16)

    # ---------- per-head QKV (+clip_qkv) + neox RoPE ----------
    cos = cos_ref[...]                                   # (T, Dh), halves duplicated
    sin = sin_ref[...]
    rot = rot_ref[...]                                   # (Dh, Dh) rotate-half matrix

    def rope(v):                                         # v: (T, Dh) f32
        vr = jnp.dot(v.astype(bf16), rot, preferred_element_type=f32)
        return v * cos + vr * sin

    group = n_heads // kv_heads
    ks, vs = [], []
    for j in range(kv_heads):
        kj = jnp.clip(jnp.dot(h1b, wk_ref[j], preferred_element_type=f32),
                      -clip_qkv, clip_qkv)
        vj = jnp.clip(jnp.dot(h1b, wv_ref[j], preferred_element_type=f32),
                      -clip_qkv, clip_qkv)
        ks.append(rope(kj).astype(bf16))                 # (T, Dh)
        vs.append(vj.astype(bf16))                       # (T, Dh)

    # ---------- causal GQA attention, out-projection accumulated per head ----------
    bias = bias_ref[...]                                 # (T, T): 0 allowed / -1e30 masked
    attn_proj = jnp.zeros((T, D), f32)
    for h in range(n_heads):
        qh = jnp.clip(jnp.dot(h1b, wq_ref[h], preferred_element_type=f32),
                      -clip_qkv, clip_qkv)
        qh = rope(qh).astype(bf16)                       # (T, Dh)
        j = h // group
        s = lax.dot_general(qh, ks[j], (((1,), (1,)), ((), ())),
                            preferred_element_type=f32) * scale + bias
        m = jnp.max(s, axis=-1, keepdims=True)
        p = jnp.exp(s - m)
        p = p * pl.reciprocal(jnp.sum(p, axis=-1, keepdims=True), approx=True)
        ctx = jnp.dot(p.astype(bf16), vs[j], preferred_element_type=f32)   # (T, Dh)
        attn_proj = attn_proj + jnp.dot(ctx.astype(bf16), wout_ref[h],
                                        preferred_element_type=f32)        # (T, D)

    # ---------- residual + norm_2 ----------
    x1 = x + attn_proj
    h2 = _layernorm_f32(x1, ln2g_ref[...], ln2b_ref[...], eps)
    h2b = h2.astype(bf16)

    # ---------- router + top-k gates (softmax -> top-k -> renormalize) ----------
    logits = jnp.dot(h2b, wrt_ref[...], preferred_element_type=f32)         # (T, E)
    lm = jnp.max(logits, axis=-1, keepdims=True)
    el = jnp.exp(logits - lm)
    probs = el * pl.reciprocal(jnp.sum(el, axis=-1, keepdims=True), approx=True)

    eidx = lax.broadcasted_iota(jnp.int32, (T, n_experts), 1).astype(f32)
    remaining = probs
    gates = jnp.zeros_like(probs)
    total = jnp.zeros((T, 1), f32)
    for _ in range(top_k):
        mx = jnp.max(remaining, axis=-1, keepdims=True)
        first = jnp.min(jnp.where(remaining >= mx, eidx, float(n_experts)),
                        axis=-1, keepdims=True)          # first index achieving the max
        sel = eidx == first
        gates = gates + jnp.where(sel, mx, 0.0)
        total = total + mx
        remaining = jnp.where(sel, -1.0, remaining)
    inv_total = pl.reciprocal(total, approx=True)        # renormalize over selected experts

    # ---------- MoE experts: SwiGLU, gated accumulation over experts ----------
    # TODO(synk): dense over experts (unselected gates are exactly 0); real sizes should
    #             use grouped/sparse routing via PrefetchScalarGridSpec.
    ffn = jnp.zeros((T, D), f32)
    for e in range(n_experts):
        ge = jnp.sum(jnp.where(eidx == float(e), gates, 0.0),
                     axis=-1, keepdims=True) * inv_total             # (T, 1)
        g = jnp.dot(h2b, w1_ref[e], preferred_element_type=f32)      # (T, I)
        u = jnp.dot(h2b, v1_ref[e], preferred_element_type=f32)      # (T, I)
        act = (g * jax.nn.sigmoid(g) * u).astype(bf16)               # silu(w1 x) * (v1 x)
        ffn = ffn + ge * jnp.dot(act, w2_ref[e], preferred_element_type=f32)

    # ---------- final residual ----------
    o_ref[...] = (x1 + ffn).astype(o_ref.dtype)


# ---------------- host-side tables & weight preparation ----------------
def _rope_tables(position_ids, head_dim, theta):
    B, S = position_ids.shape
    half = head_dim // 2
    inv_freq = 1.0 / (theta ** (jnp.arange(half, dtype=jnp.float32) * 2.0 / head_dim))
    freqs = position_ids.astype(jnp.float32).reshape(B * S, 1) * inv_freq[None, :]
    cos, sin = jnp.cos(freqs), jnp.sin(freqs)
    return (jnp.concatenate([cos, cos], axis=-1),
            jnp.concatenate([sin, sin], axis=-1))          # (T, Dh) each


def _rotate_half_matrix(head_dim):
    # x @ R == rotate_half(x) == concat([-x2, x1]); entries are 0/±1 so exact in bf16.
    half = head_dim // 2
    r = jnp.zeros((head_dim, head_dim), jnp.float32)
    r = r.at[half:, :half].set(-jnp.eye(half, dtype=jnp.float32))
    r = r.at[:half, half:].set(jnp.eye(half, dtype=jnp.float32))
    return r.astype(jnp.bfloat16)


def _causal_block_mask_bias(batch, seq):
    t = batch * seq
    row = jnp.arange(t)[:, None]
    col = jnp.arange(t)[None, :]
    allow = ((row // seq) == (col // seq)) & (col <= row)
    return jnp.where(allow, 0.0, -1e30).astype(jnp.float32)


def prepare_params(params):
    """Pre-transpose torch-convention weights to [K, N] / per-head bf16 kernel layout."""
    q_size = N_HEADS * HEAD_DIM
    kv_size = KV_N_HEADS * HEAD_DIM
    wqkv = params['wqkv']                                                    # [q+2kv, D]
    wq = jnp.transpose(wqkv[:q_size].reshape(N_HEADS, HEAD_DIM, D_MODEL), (0, 2, 1))
    wk = jnp.transpose(wqkv[q_size:q_size + kv_size]
                       .reshape(KV_N_HEADS, HEAD_DIM, D_MODEL), (0, 2, 1))
    wv = jnp.transpose(wqkv[q_size + kv_size:]
                       .reshape(KV_N_HEADS, HEAD_DIM, D_MODEL), (0, 2, 1))
    wout = params['w_out'].T.reshape(N_HEADS, HEAD_DIM, D_MODEL)             # [H, Dh, D]
    wrt = params['w_router'].T                                               # [D, E]
    w1 = jnp.transpose(params['ws'][:, :FFN_HIDDEN, :], (0, 2, 1))           # [E, D, I]
    v1 = jnp.transpose(params['ws'][:, FFN_HIDDEN:, :], (0, 2, 1))           # [E, D, I]
    w2 = jnp.transpose(params['w2s'], (0, 2, 1))                             # [E, I, D]
    bf = lambda a: a.astype(jnp.bfloat16)
    f32 = lambda a: a.astype(jnp.float32)
    return {
        'ln1_g': f32(params['ln1_g'].reshape(1, D_MODEL)),
        'ln1_b': f32(params['ln1_b'].reshape(1, D_MODEL)),
        'ln2_g': f32(params['ln2_g'].reshape(1, D_MODEL)),
        'ln2_b': f32(params['ln2_b'].reshape(1, D_MODEL)),
        'wq': bf(wq), 'wk': bf(wk), 'wv': bf(wv), 'wout': bf(wout),
        'wrt': bf(wrt), 'w1': bf(w1), 'v1': bf(v1), 'w2': bf(w2),
        'rot': _rotate_half_matrix(HEAD_DIM),
    }


# ---------------- forward ----------------
@jax.jit
def dbrx_block_forward(prepared, position_ids, hidden_states):
    B, S, D = hidden_states.shape
    T = B * S
    Dh = HEAD_DIM
    I = FFN_HIDDEN
    x2d = hidden_states.reshape(T, D)
    cos, sin = _rope_tables(position_ids, Dh, ROPE_THETA)
    bias = _causal_block_mask_bias(B, S)

    kern = functools.partial(
        dbrx_block_kernel,
        n_heads=N_HEADS, kv_heads=KV_N_HEADS, n_experts=NUM_EXPERTS,
        top_k=TOP_K, clip_qkv=CLIP_QKV, eps=LN_EPS,
        scale=1.0 / math.sqrt(HEAD_DIM))

    out2d = pl.pallas_call(
        kern,
        out_shape=jax.ShapeDtypeStruct((T, D), hidden_states.dtype),
        in_specs=[
            _full_spec((T, D)),
            _full_spec((1, D)), _full_spec((1, D)),
            _full_spec((1, D)), _full_spec((1, D)),
            _full_spec((N_HEADS, D, Dh)),
            _full_spec((KV_N_HEADS, D, Dh)),
            _full_spec((KV_N_HEADS, D, Dh)),
            _full_spec((N_HEADS, Dh, D)),
            _full_spec((D, NUM_EXPERTS)),
            _full_spec((NUM_EXPERTS, D, I)),
            _full_spec((NUM_EXPERTS, D, I)),
            _full_spec((NUM_EXPERTS, I, D)),
            _full_spec((T, Dh)), _full_spec((T, Dh)),
            _full_spec((Dh, Dh)),
            _full_spec((T, T)),
        ],
        out_specs=_full_spec((T, D)),
    )(x2d,
      prepared['ln1_g'], prepared['ln1_b'], prepared['ln2_g'], prepared['ln2_b'],
      prepared['wq'], prepared['wk'], prepared['wv'], prepared['wout'],
      prepared['wrt'], prepared['w1'], prepared['v1'], prepared['w2'],
      cos, sin, prepared['rot'], bias)
    return out2d.reshape(B, S, D)


# ---------------- params (torch layout, then prepared for the kernel) ----------------
def init_params(key):
    ks = jax.random.split(key, 9)

    def nrm(k, shape, scale=0.02):
        return (scale * jax.random.normal(k, shape)).astype(jnp.float32)

    qkv_out = N_HEADS * HEAD_DIM + 2 * KV_N_HEADS * HEAD_DIM
    return {
        'ln1_g': (jnp.ones((D_MODEL,), jnp.float32) + nrm(ks[0], (D_MODEL,), 0.1)),
        'ln1_b': nrm(ks[1], (D_MODEL,)),
        'ln2_g': (jnp.ones((D_MODEL,), jnp.float32) + nrm(ks[2], (D_MODEL,), 0.1)),
        'ln2_b': nrm(ks[3], (D_MODEL,)),
        'wqkv': nrm(ks[4], (qkv_out, D_MODEL)),                     # torch Linear [out, in]
        'w_out': nrm(ks[5], (D_MODEL, N_HEADS * HEAD_DIM)),
        'w_router': nrm(ks[6], (NUM_EXPERTS, D_MODEL)),
        'ws': nrm(ks[7], (NUM_EXPERTS, 2 * FFN_HIDDEN, D_MODEL)),   # merged [w1; v1]
        'w2s': nrm(ks[8], (NUM_EXPERTS, D_MODEL, FFN_HIDDEN)),
    }


if __name__ == "__main__":
    key = jax.random.PRNGKey(0)
    pkey, xkey = jax.random.split(key)
    params = init_params(pkey)
    prepared = prepare_params(params)

    B, S = 2, 8
    hidden = (0.1 * jax.random.normal(xkey, (B, S, D_MODEL))).astype(jnp.float32)
    position_ids = jnp.broadcast_to(jnp.arange(S, dtype=jnp.int32), (B, S))

    out = dbrx_block_forward(prepared, position_ids, hidden)
    out = jax.block_until_ready(out)
    assert out.shape == (B, S, D_MODEL)
    assert bool(jnp.all(jnp.isfinite(out)))
    print("KERNEL_OK")
</pallas_src>

<mosaic_0001>
module attributes {stable_mosaic.version = 11 : i64} {
  func.func @dbrx_block_kernel(%arg0: memref<16x32xf32, #tpu.memory_space<vmem>>, %arg1: memref<1x32xf32, #tpu.memory_space<vmem>>, %arg2: memref<1x32xf32, #tpu.memory_space<vmem>>, %arg3: memref<1x32xf32, #tpu.memory_space<vmem>>, %arg4: memref<1x32xf32, #tpu.memory_space<vmem>>, %arg5: memref<4x32x8xbf16, #tpu.memory_space<vmem>>, %arg6: memref<2x32x8xbf16, #tpu.memory_space<vmem>>, %arg7: memref<2x32x8xbf16, #tpu.memory_space<vmem>>, %arg8: memref<4x8x32xbf16, #tpu.memory_space<vmem>>, %arg9: memref<32x4xbf16, #tpu.memory_space<vmem>>, %arg10: memref<4x32x64xbf16, #tpu.memory_space<vmem>>, %arg11: memref<4x32x64xbf16, #tpu.memory_space<vmem>>, %arg12: memref<4x64x32xbf16, #tpu.memory_space<vmem>>, %arg13: memref<16x8xf32, #tpu.memory_space<vmem>>, %arg14: memref<16x8xf32, #tpu.memory_space<vmem>>, %arg15: memref<8x8xbf16, #tpu.memory_space<vmem>>, %arg16: memref<16x16xf32, #tpu.memory_space<vmem>>, %arg17: memref<16x32xf32, #tpu.memory_space<vmem>>) attributes {dimension_semantics = [], scalar_prefetch = 0 : i64, scratch_operands = 0 : i64, tpu.core_type = #tpu.core_type<tc>} {
    %c0 = arith.constant 0 : index
    %c0_0 = arith.constant 0 : index
    %0 = vector.load %arg0[%c0, %c0_0] : memref<16x32xf32, #tpu.memory_space<vmem>>, vector<16x32xf32>
    %c0_1 = arith.constant 0 : index
    %c0_2 = arith.constant 0 : index
    %1 = vector.load %arg1[%c0_1, %c0_2] : memref<1x32xf32, #tpu.memory_space<vmem>>, vector<1x32xf32>
    %c0_3 = arith.constant 0 : index
    %c0_4 = arith.constant 0 : index
    %2 = vector.load %arg2[%c0_3, %c0_4] : memref<1x32xf32, #tpu.memory_space<vmem>>, vector<1x32xf32>
    %cst = arith.constant dense<0.000000e+00> : vector<16xf32>
    %3 = vector.multi_reduction <add>, %0, %cst [1] : vector<16x32xf32> to vector<16xf32>
    %4 = vector.shape_cast %3 : vector<16xf32> to vector<16x1xf32>
    %cst_5 = arith.constant 3.200000e+01 : f32
    %5 = vector.broadcast %cst_5 : f32 to vector<16x1xf32>
    %6 = arith.divf %4, %5 : vector<16x1xf32>
    %7 = vector.broadcast %6 : vector<16x1xf32> to vector<16x32xf32>
    %8 = arith.subf %0, %7 : vector<16x32xf32>
    %9 = arith.mulf %8, %8 : vector<16x32xf32>
    %cst_6 = arith.constant dense<0.000000e+00> : vector<16xf32>
    %10 = vector.multi_reduction <add>, %9, %cst_6 [1] : vector<16x32xf32> to vector<16xf32>
    %11 = vector.shape_cast %10 : vector<16xf32> to vector<16x1xf32>
    %cst_7 = arith.constant 3.200000e+01 : f32
    %12 = vector.broadcast %cst_7 : f32 to vector<16x1xf32>
    %13 = arith.divf %11, %12 : vector<16x1xf32>
    %cst_8 = arith.constant 9.99999974E-6 : f32
    %14 = vector.broadcast %cst_8 : f32 to vector<16x1xf32>
    %15 = arith.addf %13, %14 : vector<16x1xf32>
    %16 = math.rsqrt %15 : vector<16x1xf32>
    %17 = vector.broadcast %16 : vector<16x1xf32> to vector<16x32xf32>
    %18 = arith.mulf %8, %17 : vector<16x32xf32>
    %19 = vector.broadcast %1 : vector<1x32xf32> to vector<16x32xf32>
    %20 = arith.mulf %18, %19 : vector<16x32xf32>
    %21 = vector.broadcast %2 : vector<1x32xf32> to vector<16x32xf32>
    %22 = arith.addf %20, %21 : vector<16x32xf32>
    %23 = arith.truncf %22 : vector<16x32xf32> to vector<16x32xbf16>
    %c0_9 = arith.constant 0 : index
    %c0_10 = arith.constant 0 : index
    %24 = vector.load %arg13[%c0_9, %c0_10] : memref<16x8xf32, #tpu.memory_space<vmem>>, vector<16x8xf32>
    %c0_11 = arith.constant 0 : index
    %c0_12 = arith.constant 0 : index
    %25 = vector.load %arg14[%c0_11, %c0_12] : memref<16x8xf32, #tpu.memory_space<vmem>>, vector<16x8xf32>
    %c0_13 = arith.constant 0 : index
    %c0_14 = arith.constant 0 : index
    %26 = vector.load %arg15[%c0_13, %c0_14] : memref<8x8xbf16, #tpu.memory_space<vmem>>, vector<8x8xbf16>
    %c0_15 = arith.constant 0 : index
    %c0_16 = arith.constant 0 : index
    %c0_17 = arith.constant 0 : index
    %27 = vector.load %arg6[%c0_15, %c0_16, %c0_17] : memref<2x32x8xbf16, #tpu.memory_space<vmem>>, vector<1x32x8xbf16>
    %28 = vector.shape_cast %27 : vector<1x32x8xbf16> to vector<32x8xbf16>
    %cst_18 = arith.constant dense<0.000000e+00> : vector<16x8xf32>
    %29 = tpu.matmul %23, %28, %cst_18 {dimension_numbers = #tpu.dot_dimension_numbers<[1], [0], [0], [1], [0, 0, 1, 1], [], []>} : vector<16x32xbf16>, vector<32x8xbf16>, vector<16x8xf32> -> vector<16x8xf32>
    %cst_19 = arith.constant -8.000000e+00 : f32
    %cst_20 = arith.constant 8.000000e+00 : f32
    %30 = vector.broadcast %cst_19 : f32 to vector<16x8xf32>
    %31 = arith.maximumf %30, %29 : vector<16x8xf32>
    %32 = vector.broadcast %cst_20 : f32 to vector<16x8xf32>
    %33 = arith.minimumf %32, %31 : vector<16x8xf32>
    %c0_21 = arith.constant 0 : index
    %c0_22 = arith.constant 0 : index
    %c0_23 = arith.constant 0 : index
    %34 = vector.load %arg7[%c0_21, %c0_22, %c0_23] : memref<2x32x8xbf16, #tpu.memory_space<vmem>>, vector<1x32x8xbf16>
    %35 = vector.shape_cast %34 : vector<1x32x8xbf16> to vector<32x8xbf16>
    %cst_24 = arith.constant dense<0.000000e+00> : vector<16x8xf32>
    %36 = tpu.matmul %23, %35, %cst_24 {dimension_numbers = #tpu.dot_dimension_numbers<[1], [0], [0], [1], [0, 0, 1, 1], [], []>} : vector<16x32xbf16>, vector<32x8xbf16>, vector<16x8xf32> -> vector<16x8xf32>
    %cst_25 = arith.constant -8.000000e+00 : f32
    %cst_26 = arith.constant 8.000000e+00 : f32
    %37 = vector.broadcast %cst_25 : f32 to vector<16x8xf32>
    %38 = arith.maximumf %37, %36 : vector<16x8xf32>
    %39 = vector.broadcast %cst_26 : f32 to vector<16x8xf32>
    %40 = arith.minimumf %39, %38 : vector<16x8xf32>
    %41 = arith.truncf %33 : vector<16x8xf32> to vector<16x8xbf16>
    %cst_27 = arith.constant dense<0.000000e+00> : vector<16x8xf32>
    %42 = tpu.matmul %41, %26, %cst_27 {dimension_numbers = #tpu.dot_dimension_numbers<[1], [0], [0], [1], [0, 0, 1, 1], [], []>} : vector<16x8xbf16>, vector<8x8xbf16>, vector<16x8xf32> -> vector<16x8xf32>
    %43 = arith.mulf %33, %24 : vector<16x8xf32>
    %44 = arith.mulf %42, %25 : vector<16x8xf32>
    %45 = arith.addf %43, %44 : vector<16x8xf32>
    %46 = arith.truncf %45 : vector<16x8xf32> to vector<16x8xbf16>
    %47 = arith.truncf %40 : vector<16x8xf32> to vector<16x8xbf16>
    %c1 = arith.constant 1 : index
    %c0_28 = arith.constant 0 : index
    %c0_29 = arith.constant 0 : index
    %48 = vector.load %arg6[%c1, %c0_28, %c0_29] : memref<2x32x8xbf16, #tpu.memory_space<vmem>>, vector<1x32x8xbf16>
    %49 = vector.shape_cast %48 : vector<1x32x8xbf16> to vector<32x8xbf16>
    %cst_30 = arith.constant dense<0.000000e+00> : vector<16x8xf32>
    %50 = tpu.matmul %23, %49, %cst_30 {dimension_numbers = #tpu.dot_dimension_numbers<[1], [0], [0], [1], [0, 0, 1, 1], [], []>} : vector<16x32xbf16>, vector<32x8xbf16>, vector<16x8xf32> -> vector<16x8xf32>
    %cst_31 = arith.constant -8.000000e+00 : f32
    %cst_32 = arith.constant 8.000000e+00 : f32
    %51 = vector.broadcast %cst_31 : f32 to vector<16x8xf32>
    %52 = arith.maximumf %51, %50 : vector<16x8xf32>
    %53 = vector.broadcast %cst_32 : f32 to vector<16x8xf32>
    %54 = arith.minimumf %53, %52 : vector<16x8xf32>
    %c1_33 = arith.constant 1 : index
    %c0_34 = arith.constant 0 : index
    %c0_35 = arith.constant 0 : index
    %55 = vector.load %arg7[%c1_33, %c0_34, %c0_35] : memref<2x32x8xbf16, #tpu.memory_space<vmem>>, vector<1x32x8xbf16>
    %56 = vector.shape_cast %55 : vector<1x32x8xbf16> to vector<32x8xbf16>
    %cst_36 = arith.constant dense<0.000000e+00> : vector<16x8xf32>
    %57 = tpu.matmul %23, %56, %cst_36 {dimension_numbers = #tpu.dot_dimension_numbers<[1], [0], [0], [1], [0, 0, 1, 1], [], []>} : vector<16x32xbf16>, vector<32x8xbf16>, vector<16x8xf32> -> vector<16x8xf32>
    %cst_37 = arith.constant -8.000000e+00 : f32
    %cst_38 = arith.constant 8.000000e+00 : f32
    %58 = vector.broadcast %cst_37 : f32 to vector<16x8xf32>
    %59 = arith.maximumf %58, %57 : vector<16x8xf32>
    %60 = vector.broadcast %cst_38 : f32 to vector<16x8xf32>
    %61 = arith.minimumf %60, %59 : vector<16x8xf32>
    %62 = arith.truncf %54 : vector<16x8xf32> to vector<16x8xbf16>
    %cst_39 = arith.constant dense<0.000000e+00> : vector<16x8xf32>
    %63 = tpu.matmul %62, %26, %cst_39 {dimension_numbers = #tpu.dot_dimension_numbers<[1], [0], [0], [1], [0, 0, 1, 1], [], []>} : vector<16x8xbf16>, vector<8x8xbf16>, vector<16x8xf32> -> vector<16x8xf32>
    %64 = arith.mulf %54, %24 : vector<16x8xf32>
    %65 = arith.mulf %63, %25 : vector<16x8xf32>
    %66 = arith.addf %64, %65 : vector<16x8xf32>
    %67 = arith.truncf %66 : vector<16x8xf32> to vector<16x8xbf16>
    %68 = arith.truncf %61 : vector<16x8xf32> to vector<16x8xbf16>
    %c0_40 = arith.constant 0 : index
    %c0_41 = arith.constant 0 : index
    %69 = vector.load %arg16[%c0_40, %c0_41] : memref<16x16xf32, #tpu.memory_space<vmem>>, vector<16x16xf32>
    %cst_42 = arith.constant 0.000000e+00 : f32
    %70 = vector.broadcast %cst_42 : f32 to vector<16x32xf32>
    %c0_43 = arith.constant 0 : index
    %c0_44 = arith.constant 0 : index
    %c0_45 = arith.constant 0 : index
    %71 = vector.load %arg5[%c0_43, %c0_44, %c0_45] : memref<4x32x8xbf16, #tpu.memory_space<vmem>>, vector<1x32x8xbf16>
    %72 = vector.shape_cast %71 : vector<1x32x8xbf16> to vector<32x8xbf16>
    %cst_46 = arith.constant dense<0.000000e+00> : vector<16x8xf32>
    %73 = tpu.matmul %23, %72, %cst_46 {dimension_numbers = #tpu.dot_dimension_numbers<[1], [0], [0], [1], [0, 0, 1, 1], [], []>} : vector<16x32xbf16>, vector<32x8xbf16>, vector<16x8xf32> -> vector<16x8xf32>
    %cst_47 = arith.constant -8.000000e+00 : f32
    %cst_48 = arith.constant 8.000000e+00 : f32
    %74 = vector.broadcast %cst_47 : f32 to vector<16x8xf32>
    %75 = arith.maximumf %74, %73 : vector<16x8xf32>
    %76 = vector.broadcast %cst_48 : f32 to vector<16x8xf32>
    %77 = arith.minimumf %76, %75 : vector<16x8xf32>
    %78 = arith.truncf %77 : vector<16x8xf32> to vector<16x8xbf16>
    %cst_49 = arith.constant dense<0.000000e+00> : vector<16x8xf32>
    %79 = tpu.matmul %78, %26, %cst_49 {dimension_numbers = #tpu.dot_dimension_numbers<[1], [0], [0], [1], [0, 0, 1, 1], [], []>} : vector<16x8xbf16>, vector<8x8xbf16>, vector<16x8xf32> -> vector<16x8xf32>
    %80 = arith.mulf %77, %24 : vector<16x8xf32>
    %81 = arith.mulf %79, %25 : vector<16x8xf32>
    %82 = arith.addf %80, %81 : vector<16x8xf32>
    %83 = arith.truncf %82 : vector<16x8xf32> to vector<16x8xbf16>
    %cst_50 = arith.constant dense<0.000000e+00> : vector<16x16xf32>
    %84 = tpu.matmul %83, %46, %cst_50 {dimension_numbers = #tpu.dot_dimension_numbers<[1], [1], [0], [0], [0, 0, 1, 0], [], []>} : vector<16x8xbf16>, vector<16x8xbf16>, vector<16x16xf32> -> vector<16x16xf32>
    %cst_51 = arith.constant 0.353553385 : f32
    %85 = vector.broadcast %cst_51 : f32 to vector<16x16xf32>
    %86 = arith.mulf %84, %85 : vector<16x16xf32>
    %87 = arith.addf %86, %69 : vector<16x16xf32>
    %cst_52 = arith.constant dense<0xFF800000> : vector<16xf32>
    %88 = vector.multi_reduction <maximumf>, %87, %cst_52 [1] : vector<16x16xf32> to vector<16xf32>
    %89 = vector.shape_cast %88 : vector<16xf32> to vector<16x1xf32>
    %90 = vector.broadcast %89 : vector<16x1xf32> to vector<16x16xf32>
    %91 = arith.subf %87, %90 : vector<16x16xf32>
    %92 = math.exp %91 : vector<16x16xf32>
    %cst_53 = arith.constant dense<0.000000e+00> : vector<16xf32>
    %93 = vector.multi_reduction <add>, %92, %cst_53 [1] : vector<16x16xf32> to vector<16xf32>
    %94 = vector.shape_cast %93 : vector<16xf32> to vector<16x1xf32>
    %95 = tpu.reciprocal %94 {approx = true} : vector<16x1xf32> -> vector<16x1xf32>
    %96 = vector.broadcast %95 : vector<16x1xf32> to vector<16x16xf32>
    %97 = arith.mulf %92, %96 : vector<16x16xf32>
    %98 = arith.truncf %97 : vector<16x16xf32> to vector<16x16xbf16>
    %cst_54 = arith.constant dense<0.000000e+00> : vector<16x8xf32>
    %99 = tpu.matmul %98, %47, %cst_54 {dimension_numbers = #tpu.dot_dimension_numbers<[1], [0], [0], [1], [0, 0, 1, 1], [], []>} : vector<16x16xbf16>, vector<16x8xbf16>, vector<16x8xf32> -> vector<16x8xf32>
    %100 = arith.truncf %99 : vector<16x8xf32> to vector<16x8xbf16>
    %c0_55 = arith.constant 0 : index
    %c0_56 = arith.constant 0 : index
    %c0_57 = arith.constant 0 : index
    %101 = vector.load %arg8[%c0_55, %c0_56, %c0_57] : memref<4x8x32xbf16, #tpu.memory_space<vmem>>, vector<1x8x32xbf16>
    %102 = vector.shape_cast %101 : vector<1x8x32xbf16> to vector<8x32xbf16>
    %cst_58 = arith.constant dense<0.000000e+00> : vector<16x32xf32>
    %103 = tpu.matmul %100, %102, %cst_58 {dimension_numbers = #tpu.dot_dimension_numbers<[1], [0], [0], [1], [0, 0, 1, 1], [], []>} : vector<16x8xbf16>, vector<8x32xbf16>, vector<16x32xf32> -> vector<16x32xf32>
    %104 = arith.addf %70, %103 : vector<16x32xf32>
    %c1_59 = arith.constant 1 : index
    %c0_60 = arith.constant 0 : index
    %c0_61 = arith.constant 0 : index
    %105 = vector.load %arg5[%c1_59, %c0_60, %c0_61] : memref<4x32x8xbf16, #tpu.memory_space<vmem>>, vector<1x32x8xbf16>
    %106 = vector.shape_cast %105 : vector<1x32x8xbf16> to vector<32x8xbf16>
    %cst_62 = arith.constant dense<0.000000e+00> : vector<16x8xf32>
    %107 = tpu.matmul %23, %106, %cst_62 {dimension_numbers = #tpu.dot_dimension_numbers<[1], [0], [0], [1], [0, 0, 1, 1], [], []>} : vector<16x32xbf16>, vector<32x8xbf16>, vector<16x8xf32> -> vector<16x8xf32>
    %cst_63 = arith.constant -8.000000e+00 : f32
    %cst_64 = arith.constant 8.000000e+00 : f32
    %108 = vector.broadcast %cst_63 : f32 to vector<16x8xf32>
    %109 = arith.maximumf %108, %107 : vector<16x8xf32>
    %110 = vector.broadcast %cst_64 : f32 to vector<16x8xf32>
    %111 = arith.minimumf %110, %109 : vector<16x8xf32>
    %112 = arith.truncf %111 : vector<16x8xf32> to vector<16x8xbf16>
    %cst_65 = arith.constant dense<0.000000e+00> : vector<16x8xf32>
    %113 = tpu.matmul %112, %26, %cst_65 {dimension_numbers = #tpu.dot_dimension_numbers<[1], [0], [0], [1], [0, 0, 1, 1], [], []>} : vector<16x8xbf16>, vector<8x8xbf16>, vector<16x8xf32> -> vector<16x8xf32>
    %114 = arith.mulf %111, %24 : vector<16x8xf32>
    %115 = arith.mulf %113, %25 : vector<16x8xf32>
    %116 = arith.addf %114, %115 : vector<16x8xf32>
    %117 = arith.truncf %116 : vector<16x8xf32> to vector<16x8xbf16>
    %cst_66 = arith.constant dense<0.000000e+00> : vector<16x16xf32>
    %118 = tpu.matmul %117, %46, %cst_66 {dimension_numbers = #tpu.dot_dimension_numbers<[1], [1], [0], [0], [0, 0, 1, 0], [], []>} : vector<16x8xbf16>, vector<16x8xbf16>, vector<16x16xf32> -> vector<16x16xf32>
    %cst_67 = arith.constant 0.353553385 : f32
    %119 = vector.broadcast %cst_67 : f32 to vector<16x16xf32>
    %120 = arith.mulf %118, %119 : vector<16x16xf32>
    %121 = arith.addf %120, %69 : vector<16x16xf32>
    %cst_68 = arith.constant dense<0xFF800000> : vector<16xf32>
    %122 = vector.multi_reduction <maximumf>, %121, %cst_68 [1] : vector<16x16xf32> to vector<16xf32>
    %123 = vector.shape_cast %122 : vector<16xf32> to vector<16x1xf32>
    %124 = vector.broadcast %123 : vector<16x1xf32> to vector<16x16xf32>
    %125 = arith.subf %121, %124 : vector<16x16xf32>
    %126 = math.exp %125 : vector<16x16xf32>
    %cst_69 = arith.constant dense<0.000000e+00> : vector<16xf32>
    %127 = vector.multi_reduction <add>, %126, %cst_69 [1] : vector<16x16xf32> to vector<16xf32>
    %128 = vector.shape_cast %127 : vector<16xf32> to vector<16x1xf32>
    %129 = tpu.reciprocal %128 {approx = true} : vector<16x1xf32> -> vector<16x1xf32>
    %130 = vector.broadcast %129 : vector<16x1xf32> to vector<16x16xf32>
    %131 = arith.mulf %126, %130 : vector<16x16xf32>
    %132 = arith.truncf %131 : vector<16x16xf32> to vector<16x16xbf16>
    %cst_70 = arith.constant dense<0.000000e+00> : vector<16x8xf32>
    %133 = tpu.matmul %132, %47, %cst_70 {dimension_numbers = #tpu.dot_dimension_numbers<[1], [0], [0], [1], [0, 0, 1, 1], [], []>} : vector<16x16xbf16>, vector<16x8xbf16>, vector<16x8xf32> -> vector<16x8xf32>
    %134 = arith.truncf %133 : vector<16x8xf32> to vector<16x8xbf16>
    %c1_71 = arith.constant 1 : index
    %c0_72 = arith.constant 0 : index
    %c0_73 = arith.constant 0 : index
    %135 = vector.load %arg8[%c1_71, %c0_72, %c0_73] : memref<4x8x32xbf16, #tpu.memory_space<vmem>>, vector<1x8x32xbf16>
    %136 = vector.shape_cast %135 : vector<1x8x32xbf16> to vector<8x32xbf16>
    %cst_74 = arith.constant dense<0.000000e+00> : vector<16x32xf32>
    %137 = tpu.matmul %134, %136, %cst_74 {dimension_numbers = #tpu.dot_dimension_numbers<[1], [0], [0], [1], [0, 0, 1, 1], [], []>} : vector<16x8xbf16>, vector<8x32xbf16>, vector<16x32xf32> -> vector<16x32xf32>
    %138 = arith.addf %104, %137 : vector<16x32xf32>
    %c2 = arith.constant 2 : index
    %c0_75 = arith.constant 0 : index
    %c0_76 = arith.constant 0 : index
    %139 = vector.load %arg5[%c2, %c0_75, %c0_76] : memref<4x32x8xbf16, #tpu.memory_space<vmem>>, vector<1x32x8xbf16>
    %140 = vector.shape_cast %139 : vector<1x32x8xbf16> to vector<32x8xbf16>
    %cst_77 = arith.constant dense<0.000000e+00> : vector<16x8xf32>
    %141 = tpu.matmul %23, %140, %cst_77 {dimension_numbers = #tpu.dot_dimension_numbers<[1], [0], [0], [1], [0, 0, 1, 1], [], []>} : vector<16x32xbf16>, vector<32x8xbf16>, vector<16x8xf32> -> vector<16x8xf32>
    %cst_78 = arith.constant -8.000000e+00 : f32
    %cst_79 = arith.constant 8.000000e+00 : f32
    %142 = vector.broadcast %cst_78 : f32 to vector<16x8xf32>
    %143 = arith.maximumf %142, %141 : vector<16x8xf32>
    %144 = vector.broadcast %cst_79 : f32 to vector<16x8xf32>
    %145 = arith.minimumf %144, %143 : vector<16x8xf32>
    %146 = arith.truncf %145 : vector<16x8xf32> to vector<16x8xbf16>
    %cst_80 = arith.constant dense<0.000000e+00> : vector<16x8xf32>
    %147 = tpu.matmul %146, %26, %cst_80 {dimension_numbers = #tpu.dot_dimension_numbers<[1], [0], [0], [1], [0, 0, 1, 1], [], []>} : vector<16x8xbf16>, vector<8x8xbf16>, vector<16x8xf32> -> vector<16x8xf32>
    %148 = arith.mulf %145, %24 : vector<16x8xf32>
    %149 = arith.mulf %147, %25 : vector<16x8xf32>
    %150 = arith.addf %148, %149 : vector<16x8xf32>
    %151 = arith.truncf %150 : vector<16x8xf32> to vector<16x8xbf16>
    %cst_81 = arith.constant dense<0.000000e+00> : vector<16x16xf32>
    %152 = tpu.matmul %151, %67, %cst_81 {dimension_numbers = #tpu.dot_dimension_numbers<[1], [1], [0], [0], [0, 0, 1, 0], [], []>} : vector<16x8xbf16>, vector<16x8xbf16>, vector<16x16xf32> -> vector<16x16xf32>
    %cst_82 = arith.constant 0.353553385 : f32
    %153 = vector.broadcast %cst_82 : f32 to vector<16x16xf32>
    %154 = arith.mulf %152, %153 : vector<16x16xf32>
    %155 = arith.addf %154, %69 : vector<16x16xf32>
    %cst_83 = arith.constant dense<0xFF800000> : vector<16xf32>
    %156 = vector.multi_reduction <maximumf>, %155, %cst_83 [1] : vector<16x16xf32> to vector<16xf32>
    %157 = vector.shape_cast %156 : vector<16xf32> to vector<16x1xf32>
    %158 = vector.broadcast %157 : vector<16x1xf32> to vector<16x16xf32>
    %159 = arith.subf %155, %158 : vector<16x16xf32>
    %160 = math.exp %159 : vector<16x16xf32>
    %cst_84 = arith.constant dense<0.000000e+00> : vector<16xf32>
    %161 = vector.multi_reduction <add>, %160, %cst_84 [1] : vector<16x16xf32> to vector<16xf32>
    %162 = vector.shape_cast %161 : vector<16xf32> to vector<16x1xf32>
    %163 = tpu.reciprocal %162 {approx = true} : vector<16x1xf32> -> vector<16x1xf32>
    %164 = vector.broadcast %163 : vector<16x1xf32> to vector<16x16xf32>
    %165 = arith.mulf %160, %164 : vector<16x16xf32>
    %166 = arith.truncf %165 : vector<16x16xf32> to vector<16x16xbf16>
    %cst_85 = arith.constant dense<0.000000e+00> : vector<16x8xf32>
    %167 = tpu.matmul %166, %68, %cst_85 {dimension_numbers = #tpu.dot_dimension_numbers<[1], [0], [0], [1], [0, 0, 1, 1], [], []>} : vector<16x16xbf16>, vector<16x8xbf16>, vector<16x8xf32> -> vector<16x8xf32>
    %168 = arith.truncf %167 : vector<16x8xf32> to vector<16x8xbf16>
    %c2_86 = arith.constant 2 : index
    %c0_87 = arith.constant 0 : index
    %c0_88 = arith.constant 0 : index
    %169 = vector.load %arg8[%c2_86, %c0_87, %c0_88] : memref<4x8x32xbf16, #tpu.memory_space<vmem>>, vector<1x8x32xbf16>
    %170 = vector.shape_cast %169 : vector<1x8x32xbf16> to vector<8x32xbf16>
    %cst_89 = arith.constant dense<0.000000e+00> : vector<16x32xf32>
    %171 = tpu.matmul %168, %170, %cst_89 {dimension_numbers = #tpu.dot_dimension_numbers<[1], [0], [0], [1], [0, 0, 1, 1], [], []>} : vector<16x8xbf16>, vector<8x32xbf16>, vector<16x32xf32> -> vector<16x32xf32>
    %172 = arith.addf %138, %171 : vector<16x32xf32>
    %c3 = arith.constant 3 : index
    %c0_90 = arith.constant 0 : index
    %c0_91 = arith.constant 0 : index
    %173 = vector.load %arg5[%c3, %c0_90, %c0_91] : memref<4x32x8xbf16, #tpu.memory_space<vmem>>, vector<1x32x8xbf16>
    %174 = vector.shape_cast %173 : vector<1x32x8xbf16> to vector<32x8xbf16>
    %cst_92 = arith.constant dense<0.000000e+00> : vector<16x8xf32>
    %175 = tpu.matmul %23, %174, %cst_92 {dimension_numbers = #tpu.dot_dimension_numbers<[1], [0], [0], [1], [0, 0, 1, 1], [], []>} : vector<16x32xbf16>, vector<32x8xbf16>, vector<16x8xf32> -> vector<16x8xf32>
    %cst_93 = arith.constant -8.000000e+00 : f32
    %cst_94 = arith.constant 8.000000e+00 : f32
    %176 = vector.broadcast %cst_93 : f32 to vector<16x8xf32>
    %177 = arith.maximumf %176, %175 : vector<16x8xf32>
    %178 = vector.broadcast %cst_94 : f32 to vector<16x8xf32>
    %179 = arith.minimumf %178, %177 : vector<16x8xf32>
    %180 = arith.truncf %179 : vector<16x8xf32> to vector<16x8xbf16>
    %cst_95 = arith.constant dense<0.000000e+00> : vector<16x8xf32>
    %181 = tpu.matmul %180, %26, %cst_95 {dimension_numbers = #tpu.dot_dimension_numbers<[1], [0], [0], [1], [0, 0, 1, 1], [], []>} : vector<16x8xbf16>, vector<8x8xbf16>, vector<16x8xf32> -> vector<16x8xf32>
    %182 = arith.mulf %179, %24 : vector<16x8xf32>
    %183 = arith.mulf %181, %25 : vector<16x8xf32>
    %184 = arith.addf %182, %183 : vector<16x8xf32>
    %185 = arith.truncf %184 : vector<16x8xf32> to vector<16x8xbf16>
    %cst_96 = arith.constant dense<0.000000e+00> : vector<16x16xf32>
    %186 = tpu.matmul %185, %67, %cst_96 {dimension_numbers = #tpu.dot_dimension_numbers<[1], [1], [0], [0], [0, 0, 1, 0], [], []>} : vector<16x8xbf16>, vector<16x8xbf16>, vector<16x16xf32> -> vector<16x16xf32>
    %cst_97 = arith.constant 0.353553385 : f32
    %187 = vector.broadcast %cst_97 : f32 to vector<16x16xf32>
    %188 = arith.mulf %186, %187 : vector<16x16xf32>
    %189 = arith.addf %188, %69 : vector<16x16xf32>
    %cst_98 = arith.constant dense<0xFF800000> : vector<16xf32>
    %190 = vector.multi_reduction <maximumf>, %189, %cst_98 [1] : vector<16x16xf32> to vector<16xf32>
    %191 = vector.shape_cast %190 : vector<16xf32> to vector<16x1xf32>
    %192 = vector.broadcast %191 : vector<16x1xf32> to vector<16x16xf32>
    %193 = arith.subf %189, %192 : vector<16x16xf32>
    %194 = math.exp %193 : vector<16x16xf32>
    %cst_99 = arith.constant dense<0.000000e+00> : vector<16xf32>
    %195 = vector.multi_reduction <add>, %194, %cst_99 [1] : vector<16x16xf32> to vector<16xf32>
    %196 = vector.shape_cast %195 : vector<16xf32> to vector<16x1xf32>
    %197 = tpu.reciprocal %196 {approx = true} : vector<16x1xf32> -> vector<16x1xf32>
    %198 = vector.broadcast %197 : vector<16x1xf32> to vector<16x16xf32>
    %199 = arith.mulf %194, %198 : vector<16x16xf32>
    %200 = arith.truncf %199 : vector<16x16xf32> to vector<16x16xbf16>
    %cst_100 = arith.constant dense<0.000000e+00> : vector<16x8xf32>
    %201 = tpu.matmul %200, %68, %cst_100 {dimension_numbers = #tpu.dot_dimension_numbers<[1], [0], [0], [1], [0, 0, 1, 1], [], []>} : vector<16x16xbf16>, vector<16x8xbf16>, vector<16x8xf32> -> vector<16x8xf32>
    %202 = arith.truncf %201 : vector<16x8xf32> to vector<16x8xbf16>
    %c3_101 = arith.constant 3 : index
    %c0_102 = arith.constant 0 : index
    %c0_103 = arith.constant 0 : index
    %203 = vector.load %arg8[%c3_101, %c0_102, %c0_103] : memref<4x8x32xbf16, #tpu.memory_space<vmem>>, vector<1x8x32xbf16>
    %204 = vector.shape_cast %203 : vector<1x8x32xbf16> to vector<8x32xbf16>
    %cst_104 = arith.constant dense<0.000000e+00> : vector<16x32xf32>
    %205 = tpu.matmul %202, %204, %cst_104 {dimension_numbers = #tpu.dot_dimension_numbers<[1], [0], [0], [1], [0, 0, 1, 1], [], []>} : vector<16x8xbf16>, vector<8x32xbf16>, vector<16x32xf32> -> vector<16x32xf32>
    %206 = arith.addf %172, %205 : vector<16x32xf32>
    %207 = arith.addf %0, %206 : vector<16x32xf32>
    %c0_105 = arith.constant 0 : index
    %c0_106 = arith.constant 0 : index
    %208 = vector.load %arg3[%c0_105, %c0_106] : memref<1x32xf32, #tpu.memory_space<vmem>>, vector<1x32xf32>
    %c0_107 = arith.constant 0 : index
    %c0_108 = arith.constant 0 : index
    %209 = vector.load %arg4[%c0_107, %c0_108] : memref<1x32xf32, #tpu.memory_space<vmem>>, vector<1x32xf32>
    %cst_109 = arith.constant dense<0.000000e+00> : vector<16xf32>
    %210 = vector.multi_reduction <add>, %207, %cst_109 [1] : vector<16x32xf32> to vector<16xf32>
    %211 = vector.shape_cast %210 : vector<16xf32> to vector<16x1xf32>
    %cst_110 = arith.constant 3.200000e+01 : f32
    %212 = vector.broadcast %cst_110 : f32 to vector<16x1xf32>
    %213 = arith.divf %211, %212 : vector<16x1xf32>
    %214 = vector.broadcast %213 : vector<16x1xf32> to vector<16x32xf32>
    %215 = arith.subf %207, %214 : vector<16x32xf32>
    %216 = arith.mulf %215, %215 : vector<16x32xf32>
    %cst_111 = arith.constant dense<0.000000e+00> : vector<16xf32>
    %217 = vector.multi_reduction <add>, %216, %cst_111 [1] : vector<16x32xf32> to vector<16xf32>
    %218 = vector.shape_cast %217 : vector<16xf32> to vector<16x1xf32>
    %cst_112 = arith.constant 3.200000e+01 : f32
    %219 = vector.broadcast %cst_112 : f32 to vector<16x1xf32>
    %220 = arith.divf %218, %219 : vector<16x1xf32>
    %cst_113 = arith.constant 9.99999974E-6 : f32
    %221 = vector.broadcast %cst_113 : f32 to vector<16x1xf32>
    %222 = arith.addf %220, %221 : vector<16x1xf32>
    %223 = math.rsqrt %222 : vector<16x1xf32>
    %224 = vector.broadcast %223 : vector<16x1xf32> to vector<16x32xf32>
    %225 = arith.mulf %215, %224 : vector<16x32xf32>
    %226 = vector.broadcast %208 : vector<1x32xf32> to vector<16x32xf32>
    %227 = arith.mulf %225, %226 : vector<16x32xf32>
    %228 = vector.broadcast %209 : vector<1x32xf32> to vector<16x32xf32>
    %229 = arith.addf %227, %228 : vector<16x32xf32>
    %230 = arith.truncf %229 : vector<16x32xf32> to vector<16x32xbf16>
    %c0_114 = arith.constant 0 : index
    %c0_115 = arith.constant 0 : index
    %231 = vector.load %arg9[%c0_114, %c0_115] : memref<32x4xbf16, #tpu.memory_space<vmem>>, vector<32x4xbf16>
    %cst_116 = arith.constant dense<0.000000e+00> : vector<16x4xf32>
    %232 = tpu.matmul %230, %231, %cst_116 {dimension_numbers = #tpu.dot_dimension_numbers<[1], [0], [0], [1], [0, 0, 1, 1], [], []>} : vector<16x32xbf16>, vector<32x4xbf16>, vector<16x4xf32> -> vector<16x4xf32>
    %cst_117 = arith.constant dense<0xFF800000> : vector<16xf32>
    %233 = vector.multi_reduction <maximumf>, %232, %cst_117 [1] : vector<16x4xf32> to vector<16xf32>
    %234 = vector.shape_cast %233 : vector<16xf32> to vector<16x1xf32>
    %235 = vector.broadcast %234 : vector<16x1xf32> to vector<16x4xf32>
    %236 = arith.subf %232, %235 : vector<16x4xf32>
    %237 = math.exp %236 : vector<16x4xf32>
    %cst_118 = arith.constant dense<0.000000e+00> : vector<16xf32>
    %238 = vector.multi_reduction <add>, %237, %cst_118 [1] : vector<16x4xf32> to vector<16xf32>
    %239 = vector.shape_cast %238 : vector<16xf32> to vector<16x1xf32>
    %240 = tpu.reciprocal %239 {approx = true} : vector<16x1xf32> -> vector<16x1xf32>
    %241 = vector.broadcast %240 : vector<16x1xf32> to vector<16x4xf32>
    %242 = arith.mulf %237, %241 : vector<16x4xf32>
    %243 = tpu.iota {dimensions = array<i32: 1>} : vector<16x4xi32>
    %244 = arith.sitofp %243 : vector<16x4xi32> to vector<16x4xf32>
    %cst_119 = arith.constant 0.000000e+00 : f32
    %245 = vector.broadcast %cst_119 : f32 to vector<16x4xf32>
    %cst_120 = arith.constant 0.000000e+00 : f32
    %246 = vector.broadcast %cst_120 : f32 to vector<16x1xf32>
    %cst_121 = arith.constant dense<0xFF800000> : vector<16xf32>
    %247 = vector.multi_reduction <maximumf>, %242, %cst_121 [1] : vector<16x4xf32> to vector<16xf32>
    %248 = vector.shape_cast %247 : vector<16xf32> to vector<16x1xf32>
    %249 = vector.broadcast %248 : vector<16x1xf32> to vector<16x4xf32>
    %250 = arith.cmpf oge, %242, %249 : vector<16x4xf32>
    %cst_122 = arith.constant 4.000000e+00 : f32
    %251 = vector.broadcast %cst_122 : f32 to vector<16x4xf32>
    %252 = arith.select %250, %244, %251 : vector<16x4xi1>, vector<16x4xf32>
    %cst_123 = arith.constant dense<0x7F800000> : vector<16xf32>
    %253 = vector.multi_reduction <minimumf>, %252, %cst_123 [1] : vector<16x4xf32> to vector<16xf32>
    %254 = vector.shape_cast %253 : vector<16xf32> to vector<16x1xf32>
    %255 = vector.broadcast %254 : vector<16x1xf32> to vector<16x4xf32>
    %256 = arith.cmpf oeq, %244, %255 : vector<16x4xf32>
    %cst_124 = arith.constant 0.000000e+00 : f32
    %257 = vector.shape_cast %248 : vector<16x1xf32> to vector<16x1xf32>
    %258 = vector.broadcast %257 : vector<16x1xf32> to vector<16x4xf32>
    %259 = vector.broadcast %cst_124 : f32 to vector<16x4xf32>
    %260 = arith.select %256, %258, %259 : vector<16x4xi1>, vector<16x4xf32>
    %261 = arith.addf %245, %260 : vector<16x4xf32>
    %262 = arith.addf %246, %248 : vector<16x1xf32>
    %cst_125 = arith.constant -1.000000e+00 : f32
    %263 = vector.broadcast %cst_125 : f32 to vector<16x4xf32>
    %264 = arith.select %256, %263, %242 : vector<16x4xi1>, vector<16x4xf32>
    %cst_126 = arith.constant dense<0xFF800000> : vector<16xf32>
    %265 = vector.multi_reduction <maximumf>, %264, %cst_126 [1] : vector<16x4xf32> to vector<16xf32>
    %266 = vector.shape_cast %265 : vector<16xf32> to vector<16x1xf32>
    %267 = vector.broadcast %266 : vector<16x1xf32> to vector<16x4xf32>
    %268 = arith.cmpf oge, %264, %267 : vector<16x4xf32>
    %cst_127 = arith.constant 4.000000e+00 : f32
    %269 = vector.broadcast %cst_127 : f32 to vector<16x4xf32>
    %270 = arith.select %268, %244, %269 : vector<16x4xi1>, vector<16x4xf32>
    %cst_128 = arith.constant dense<0x7F800000> : vector<16xf32>
    %271 = vector.multi_reduction <minimumf>, %270, %cst_128 [1] : vector<16x4xf32> to vector<16xf32>
    %272 = vector.shape_cast %271 : vector<16xf32> to vector<16x1xf32>
    %273 = vector.broadcast %272 : vector<16x1xf32> to vector<16x4xf32>
    %274 = arith.cmpf oeq, %244, %273 : vector<16x4xf32>
    %cst_129 = arith.constant 0.000000e+00 : f32
    %275 = vector.shape_cast %266 : vector<16x1xf32> to vector<16x1xf32>
    %276 = vector.broadcast %275 : vector<16x1xf32> to vector<16x4xf32>
    %277 = vector.broadcast %cst_129 : f32 to vector<16x4xf32>
    %278 = arith.select %274, %276, %277 : vector<16x4xi1>, vector<16x4xf32>
    %279 = arith.addf %261, %278 : vector<16x4xf32>
    %280 = arith.addf %262, %266 : vector<16x1xf32>
    %281 = tpu.reciprocal %280 {approx = true} : vector<16x1xf32> -> vector<16x1xf32>
    %cst_130 = arith.constant 0.000000e+00 : f32
    %282 = vector.broadcast %cst_130 : f32 to vector<16x32xf32>
    %cst_131 = arith.constant 0.000000e+00 : f32
    %283 = vector.broadcast %cst_131 : f32 to vector<16x4xf32>
    %284 = arith.cmpf oeq, %244, %283 : vector<16x4xf32>
    %cst_132 = arith.constant 0.000000e+00 : f32
    %285 = vector.broadcast %cst_132 : f32 to vector<16x4xf32>
    %286 = arith.select %284, %279, %285 : vector<16x4xi1>, vector<16x4xf32>
    %cst_133 = arith.constant dense<0.000000e+00> : vector<16xf32>
    %287 = vector.multi_reduction <add>, %286, %cst_133 [1] : vector<16x4xf32> to vector<16xf32>
    %288 = vector.shape_cast %287 : vector<16xf32> to vector<16x1xf32>
    %289 = arith.mulf %288, %281 : vector<16x1xf32>
    %c0_134 = arith.constant 0 : index
    %c0_135 = arith.constant 0 : index
    %c0_136 = arith.constant 0 : index
    %290 = vector.load %arg10[%c0_134, %c0_135, %c0_136] : memref<4x32x64xbf16, #tpu.memory_space<vmem>>, vector<1x32x64xbf16>
    %291 = vector.shape_cast %290 : vector<1x32x64xbf16> to vector<32x64xbf16>
    %cst_137 = arith.constant dense<0.000000e+00> : vector<16x64xf32>
    %292 = tpu.matmul %230, %291, %cst_137 {dimension_numbers = #tpu.dot_dimension_numbers<[1], [0], [0], [1], [0, 0, 1, 1], [], []>} : vector<16x32xbf16>, vector<32x64xbf16>, vector<16x64xf32> -> vector<16x64xf32>
    %c0_138 = arith.constant 0 : index
    %c0_139 = arith.constant 0 : index
    %c0_140 = arith.constant 0 : index
    %293 = vector.load %arg11[%c0_138, %c0_139, %c0_140] : memref<4x32x64xbf16, #tpu.memory_space<vmem>>, vector<1x32x64xbf16>
    %294 = vector.shape_cast %293 : vector<1x32x64xbf16> to vector<32x64xbf16>
    %cst_141 = arith.constant dense<0.000000e+00> : vector<16x64xf32>
    %295 = tpu.matmul %230, %294, %cst_141 {dimension_numbers = #tpu.dot_dimension_numbers<[1], [0], [0], [1], [0, 0, 1, 1], [], []>} : vector<16x32xbf16>, vector<32x64xbf16>, vector<16x64xf32> -> vector<16x64xf32>
    %296 = arith.negf %292 : vector<16x64xf32>
    %297 = math.exp %296 : vector<16x64xf32>
    %cst_142 = arith.constant 1.000000e+00 : f32
    %298 = vector.broadcast %cst_142 : f32 to vector<16x64xf32>
    %299 = arith.addf %298, %297 : vector<16x64xf32>
    %300 = arith.divf %298, %299 : vector<16x64xf32>
    %301 = arith.mulf %292, %300 : vector<16x64xf32>
    %302 = arith.mulf %301, %295 : vector<16x64xf32>
    %303 = arith.truncf %302 : vector<16x64xf32> to vector<16x64xbf16>
    %c0_143 = arith.constant 0 : index
    %c0_144 = arith.constant 0 : index
    %c0_145 = arith.constant 0 : index
    %304 = vector.load %arg12[%c0_143, %c0_144, %c0_145] : memref<4x64x32xbf16, #tpu.memory_space<vmem>>, vector<1x64x32xbf16>
    %305 = vector.shape_cast %304 : vector<1x64x32xbf16> to vector<64x32xbf16>
    %cst_146 = arith.constant dense<0.000000e+00> : vector<16x32xf32>
    %306 = tpu.matmul %303, %305, %cst_146 {dimension_numbers = #tpu.dot_dimension_numbers<[1], [0], [0], [1], [0, 0, 1, 1], [], []>} : vector<16x64xbf16>, vector<64x32xbf16>, vector<16x32xf32> -> vector<16x32xf32>
    %307 = vector.broadcast %289 : vector<16x1xf32> to vector<16x32xf32>
    %308 = arith.mulf %307, %306 : vector<16x32xf32>
    %309 = arith.addf %282, %308 : vector<16x32xf32>
    %cst_147 = arith.constant 1.000000e+00 : f32
    %310 = vector.broadcast %cst_147 : f32 to vector<16x4xf32>
    %311 = arith.cmpf oeq, %244, %310 : vector<16x4xf32>
    %cst_148 = arith.constant 0.000000e+00 : f32
    %312 = vector.broadcast %cst_148 : f32 to vector<16x4xf32>
    %313 = arith.select %311, %279, %312 : vector<16x4xi1>, vector<16x4xf32>
    %cst_149 = arith.constant dense<0.000000e+00> : vector<16xf32>
    %314 = vector.multi_reduction <add>, %313, %cst_149 [1] : vector<16x4xf32> to vector<16xf32>
    %315 = vector.shape_cast %314 : vector<16xf32> to vector<16x1xf32>
    %316 = arith.mulf %315, %281 : vector<16x1xf32>
    %c1_150 = arith.constant 1 : index
    %c0_151 = arith.constant 0 : index
    %c0_152 = arith.constant 0 : index
    %317 = vector.load %arg10[%c1_150, %c0_151, %c0_152] : memref<4x32x64xbf16, #tpu.memory_space<vmem>>, vector<1x32x64xbf16>
    %318 = vector.shape_cast %317 : vector<1x32x64xbf16> to vector<32x64xbf16>
    %cst_153 = arith.constant dense<0.000000e+00> : vector<16x64xf32>
    %319 = tpu.matmul %230, %318, %cst_153 {dimension_numbers = #tpu.dot_dimension_numbers<[1], [0], [0], [1], [0, 0, 1, 1], [], []>} : vector<16x32xbf16>, vector<32x64xbf16>, vector<16x64xf32> -> vector<16x64xf32>
    %c1_154 = arith.constant 1 : index
    %c0_155 = arith.constant 0 : index
    %c0_156 = arith.constant 0 : index
    %320 = vector.load %arg11[%c1_154, %c0_155, %c0_156] : memref<4x32x64xbf16, #tpu.memory_space<vmem>>, vector<1x32x64xbf16>
    %321 = vector.shape_cast %320 : vector<1x32x64xbf16> to vector<32x64xbf16>
    %cst_157 = arith.constant dense<0.000000e+00> : vector<16x64xf32>
    %322 = tpu.matmul %230, %321, %cst_157 {dimension_numbers = #tpu.dot_dimension_numbers<[1], [0], [0], [1], [0, 0, 1, 1], [], []>} : vector<16x32xbf16>, vector<32x64xbf16>, vector<16x64xf32> -> vector<16x64xf32>
    %323 = arith.negf %319 : vector<16x64xf32>
    %324 = math.exp %323 : vector<16x64xf32>
    %cst_158 = arith.constant 1.000000e+00 : f32
    %325 = vector.broadcast %cst_158 : f32 to vector<16x64xf32>
    %326 = arith.addf %325, %324 : vector<16x64xf32>
    %327 = arith.divf %325, %326 : vector<16x64xf32>
    %328 = arith.mulf %319, %327 : vector<16x64xf32>
    %329 = arith.mulf %328, %322 : vector<16x64xf32>
    %330 = arith.truncf %329 : vector<16x64xf32> to vector<16x64xbf16>
    %c1_159 = arith.constant 1 : index
    %c0_160 = arith.constant 0 : index
    %c0_161 = arith.constant 0 : index
    %331 = vector.load %arg12[%c1_159, %c0_160, %c0_161] : memref<4x64x32xbf16, #tpu.memory_space<vmem>>, vector<1x64x32xbf16>
    %332 = vector.shape_cast %331 : vector<1x64x32xbf16> to vector<64x32xbf16>
    %cst_162 = arith.constant dense<0.000000e+00> : vector<16x32xf32>
    %333 = tpu.matmul %330, %332, %cst_162 {dimension_numbers = #tpu.dot_dimension_numbers<[1], [0], [0], [1], [0, 0, 1, 1], [], []>} : vector<16x64xbf16>, vector<64x32xbf16>, vector<16x32xf32> -> vector<16x32xf32>
    %334 = vector.broadcast %316 : vector<16x1xf32> to vector<16x32xf32>
    %335 = arith.mulf %334, %333 : vector<16x32xf32>
    %336 = arith.addf %309, %335 : vector<16x32xf32>
    %cst_163 = arith.constant 2.000000e+00 : f32
    %337 = vector.broadcast %cst_163 : f32 to vector<16x4xf32>
    %338 = arith.cmpf oeq, %244, %337 : vector<16x4xf32>
    %cst_164 = arith.constant 0.000000e+00 : f32
    %339 = vector.broadcast %cst_164 : f32 to vector<16x4xf32>
    %340 = arith.select %338, %279, %339 : vector<16x4xi1>, vector<16x4xf32>
    %cst_165 = arith.constant dense<0.000000e+00> : vector<16xf32>
    %341 = vector.multi_reduction <add>, %340, %cst_165 [1] : vector<16x4xf32> to vector<16xf32>
    %342 = vector.shape_cast %341 : vector<16xf32> to vector<16x1xf32>
    %343 = arith.mulf %342, %281 : vector<16x1xf32>
    %c2_166 = arith.constant 2 : index
    %c0_167 = arith.constant 0 : index
    %c0_168 = arith.constant 0 : index
    %344 = vector.load %arg10[%c2_166, %c0_167, %c0_168] : memref<4x32x64xbf16, #tpu.memory_space<vmem>>, vector<1x32x64xbf16>
    %345 = vector.shape_cast %344 : vector<1x32x64xbf16> to vector<32x64xbf16>
    %cst_169 = arith.constant dense<0.000000e+00> : vector<16x64xf32>
    %346 = tpu.matmul %230, %345, %cst_169 {dimension_numbers = #tpu.dot_dimension_numbers<[1], [0], [0], [1], [0, 0, 1, 1], [], []>} : vector<16x32xbf16>, vector<32x64xbf16>, vector<16x64xf32> -> vector<16x64xf32>
    %c2_170 = arith.constant 2 : index
    %c0_171 = arith.constant 0 : index
    %c0_172 = arith.constant 0 : index
    %347 = vector.load %arg11[%c2_170, %c0_171, %c0_172] : memref<4x32x64xbf16, #tpu.memory_space<vmem>>, vector<1x32x64xbf16>
    %348 = vector.shape_cast %347 : vector<1x32x64xbf16> to vector<32x64xbf16>
    %cst_173 = arith.constant dense<0.000000e+00> : vector<16x64xf32>
    %349 = tpu.matmul %230, %348, %cst_173 {dimension_numbers = #tpu.dot_dimension_numbers<[1], [0], [0], [1], [0, 0, 1, 1], [], []>} : vector<16x32xbf16>, vector<32x64xbf16>, vector<16x64xf32> -> vector<16x64xf32>
    %350 = arith.negf %346 : vector<16x64xf32>
    %351 = math.exp %350 : vector<16x64xf32>
    %cst_174 = arith.constant 1.000000e+00 : f32
    %352 = vector.broadcast %cst_174 : f32 to vector<16x64xf32>
    %353 = arith.addf %352, %351 : vector<16x64xf32>
    %354 = arith.divf %352, %353 : vector<16x64xf32>
    %355 = arith.mulf %346, %354 : vector<16x64xf32>
    %356 = arith.mulf %355, %349 : vector<16x64xf32>
    %357 = arith.truncf %356 : vector<16x64xf32> to vector<16x64xbf16>
    %c2_175 = arith.constant 2 : index
    %c0_176 = arith.constant 0 : index
    %c0_177 = arith.constant 0 : index
    %358 = vector.load %arg12[%c2_175, %c0_176, %c0_177] : memref<4x64x32xbf16, #tpu.memory_space<vmem>>, vector<1x64x32xbf16>
    %359 = vector.shape_cast %358 : vector<1x64x32xbf16> to vector<64x32xbf16>
    %cst_178 = arith.constant dense<0.000000e+00> : vector<16x32xf32>
    %360 = tpu.matmul %357, %359, %cst_178 {dimension_numbers = #tpu.dot_dimension_numbers<[1], [0], [0], [1], [0, 0, 1, 1], [], []>} : vector<16x64xbf16>, vector<64x32xbf16>, vector<16x32xf32> -> vector<16x32xf32>
    %361 = vector.broadcast %343 : vector<16x1xf32> to vector<16x32xf32>
    %362 = arith.mulf %361, %360 : vector<16x32xf32>
    %363 = arith.addf %336, %362 : vector<16x32xf32>
    %cst_179 = arith.constant 3.000000e+00 : f32
    %364 = vector.broadcast %cst_179 : f32 to vector<16x4xf32>
    %365 = arith.cmpf oeq, %244, %364 : vector<16x4xf32>
    %cst_180 = arith.constant 0.000000e+00 : f32
    %366 = vector.broadcast %cst_180 : f32 to vector<16x4xf32>
    %367 = arith.select %365, %279, %366 : vector<16x4xi1>, vector<16x4xf32>
    %cst_181 = arith.constant dense<0.000000e+00> : vector<16xf32>
    %368 = vector.multi_reduction <add>, %367, %cst_181 [1] : vector<16x4xf32> to vector<16xf32>
    %369 = vector.shape_cast %368 : vector<16xf32> to vector<16x1xf32>
    %370 = arith.mulf %369, %281 : vector<16x1xf32>
    %c3_182 = arith.constant 3 : index
    %c0_183 = arith.constant 0 : index
    %c0_184 = arith.constant 0 : index
    %371 = vector.load %arg10[%c3_182, %c0_183, %c0_184] : memref<4x32x64xbf16, #tpu.memory_space<vmem>>, vector<1x32x64xbf16>
    %372 = vector.shape_cast %371 : vector<1x32x64xbf16> to vector<32x64xbf16>
    %cst_185 = arith.constant dense<0.000000e+00> : vector<16x64xf32>
    %373 = tpu.matmul %230, %372, %cst_185 {dimension_numbers = #tpu.dot_dimension_numbers<[1], [0], [0], [1], [0, 0, 1, 1], [], []>} : vector<16x32xbf16>, vector<32x64xbf16>, vector<16x64xf32> -> vector<16x64xf32>
    %c3_186 = arith.constant 3 : index
    %c0_187 = arith.constant 0 : index
    %c0_188 = arith.constant 0 : index
    %374 = vector.load %arg11[%c3_186, %c0_187, %c0_188] : memref<4x32x64xbf16, #tpu.memory_space<vmem>>, vector<1x32x64xbf16>
    %375 = vector.shape_cast %374 : vector<1x32x64xbf16> to vector<32x64xbf16>
    %cst_189 = arith.constant dense<0.000000e+00> : vector<16x64xf32>
    %376 = tpu.matmul %230, %375, %cst_189 {dimension_numbers = #tpu.dot_dimension_numbers<[1], [0], [0], [1], [0, 0, 1, 1], [], []>} : vector<16x32xbf16>, vector<32x64xbf16>, vector<16x64xf32> -> vector<16x64xf32>
    %377 = arith.negf %373 : vector<16x64xf32>
    %378 = math.exp %377 : vector<16x64xf32>
    %cst_190 = arith.constant 1.000000e+00 : f32
    %379 = vector.broadcast %cst_190 : f32 to vector<16x64xf32>
    %380 = arith.addf %379, %378 : vector<16x64xf32>
    %381 = arith.divf %379, %380 : vector<16x64xf32>
    %382 = arith.mulf %373, %381 : vector<16x64xf32>
    %383 = arith.mulf %382, %376 : vector<16x64xf32>
    %384 = arith.truncf %383 : vector<16x64xf32> to vector<16x64xbf16>
    %c3_191 = arith.constant 3 : index
    %c0_192 = arith.constant 0 : index
    %c0_193 = arith.constant 0 : index
    %385 = vector.load %arg12[%c3_191, %c0_192, %c0_193] : memref<4x64x32xbf16, #tpu.memory_space<vmem>>, vector<1x64x32xbf16>
    %386 = vector.shape_cast %385 : vector<1x64x32xbf16> to vector<64x32xbf16>
    %cst_194 = arith.constant dense<0.000000e+00> : vector<16x32xf32>
    %387 = tpu.matmul %384, %386, %cst_194 {dimension_numbers = #tpu.dot_dimension_numbers<[1], [0], [0], [1], [0, 0, 1, 1], [], []>} : vector<16x64xbf16>, vector<64x32xbf16>, vector<16x32xf32> -> vector<16x32xf32>
    %388 = vector.broadcast %370 : vector<16x1xf32> to vector<16x32xf32>
    %389 = arith.mulf %388, %387 : vector<16x32xf32>
    %390 = arith.addf %363, %389 : vector<16x32xf32>
    %391 = arith.addf %207, %390 : vector<16x32xf32>
    %c0_195 = arith.constant 0 : index
    %c0_196 = arith.constant 0 : index
    %392 = vector.load %arg17[%c0_195, %c0_196] : memref<16x32xf32, #tpu.memory_space<vmem>>, vector<16x32xf32>
    tpu.vector_store %arg17[%c0_195, %c0_196], %391 {strides = array<i32>} : memref<16x32xf32, #tpu.memory_space<vmem>>, vector<16x32xf32>,
    return
  }
}

</mosaic_0001>

<llo_original>
// kernel: mul.10
$region0: #{mul.10}
  %s0 = inlined_call_operand.vmem [shape: f32[2,8], index: 0, kind: input, shape index: {}]
  %s1 = inlined_call_operand.vmem [shape: f32[16], index: 1, kind: output, shape index: {}]
  $region1: #{mul.10} parent=0
    #allocation0 [shape = 'u8[4096]{0}', space=vmem, size = 0x1000, scoped, tag = 'scoped mem for output reshape']
    #allocation1 [shape = 'u8[4096]{0}', space=vmem, size = 0x1000, scoped, tag = 'scoped mem for input reshape']
    %s3 = ssub.s32 4, 1
    %v4 = vld [vmem:[%s0] sm:%s3]
    %5 = vst [vmem:[#allocation1] sm:%s3] %v4
    %v6 = vld [vmem:[#allocation1] sm:$0x1]
    %vm7 = vcmask 64512
    %8 = vst.msk [vmem:[#allocation0] sm:$0x1] %vm7, %v6
    %s9 = scalar_lea.vmem [#allocation1], 1
    %v10 = vld [vmem:[%s9] sm:$0x1]
    %11 = vrot.lane.b32.xlu0 %v10, 8
    %v12 = vpop.permute.xlu0 %11
    %vm13 = vcmask 130112
    %14 = vst.msk [vmem:[#allocation0] sm:$0x1] %vm13, %v12
    %s16 = ssub.s32 2, 1
    %v17 = vld [vmem:[#allocation0] sm:%s16]
    %s19 = ssub.s32 2, 1
    %20 = vst [vmem:[%s1] sm:%s19] %v17

// kernel: dbrx_block_forward.1
$region0: #{dbrx_block_forward.1}
  #allocation0 [shape = 'u32[]', space=smem, size = 0x4, offset = 0x4, fixed_abs, tag = 'smem constant byte address 0x4 - core index']
  #allocation1 [shape = 'u32[72,128]{1,0:T(1,128)}', space=vmem, size = 0x9000, scoped, tag = 'internal scratch']
  %s0 = inlined_call_operand.vmem [shape: f32[16,32], index: 0, kind: input, shape index: {}]
  %s1 = inlined_call_operand.vmem [shape: f32[1,32], index: 1, kind: input, shape index: {}]
  %s2 = inlined_call_operand.vmem [shape: f32[1,32], index: 2, kind: input, shape index: {}]
  %s3 = inlined_call_operand.vmem [shape: f32[1,32], index: 3, kind: input, shape index: {}]
  %s4 = inlined_call_operand.vmem [shape: f32[1,32], index: 4, kind: input, shape index: {}]
  %s5 = inlined_call_operand.vmem [shape: bf16[4,32,8], index: 5, kind: input, shape index: {}]
  %s6 = inlined_call_operand.vmem [shape: bf16[2,32,8], index: 6, kind: input, shape index: {}]
  %s7 = inlined_call_operand.vmem [shape: bf16[2,32,8], index: 7, kind: input, shape index: {}]
  %s8 = inlined_call_operand.vmem [shape: bf16[4,8,32], index: 8, kind: input, shape index: {}]
  %s9 = inlined_call_operand.vmem [shape: bf16[32,4], index: 9, kind: input, shape index: {}]
  %s10 = inlined_call_operand.vmem [shape: bf16[4,32,64], index: 10, kind: input, shape index: {}]
  %s11 = inlined_call_operand.vmem [shape: bf16[4,32,64], index: 11, kind: input, shape index: {}]
  %s12 = inlined_call_operand.vmem [shape: bf16[4,64,32], index: 12, kind: input, shape index: {}]
  %s13 = inlined_call_operand.vmem [shape: f32[16,8], index: 13, kind: input, shape index: {}]
  %s14 = inlined_call_operand.vmem [shape: f32[16,8], index: 14, kind: input, shape index: {}]
  %s15 = inlined_call_operand.vmem [shape: bf16[8,8], index: 15, kind: input, shape index: {}]
  %s16 = inlined_call_operand.vmem [shape: f32[16,16], index: 16, kind: input, shape index: {}]
  %s17 = inlined_call_operand.hbm [shape: f32[16,32], index: 17, kind: output, shape index: {}]
  %s18 = sld [smem:[#allocation0]]
  $region78: #{dbrx_block_forward.1} parent=0
    _
  %s20 = ssub.s32 1, %s18
  %s21 = scalar_select 0, %s20, %s18
  $region1: #{dbrx_block_forward.1} parent=0
    #allocation2 [shape = 'u8[8192]{0}', space=vmem, size = 0x2000, scoped, tag = 'output window, operand 0, single buffered']
    #allocation3 [shape = 's32[1]{0}', space=sflag, size = 0x4, scoped, tag = 'scoped memory for dbrx_block_forward.1']
    %22 = vsyncpa [#allocation3], 0
    // Predicated region
    $region2: #{dbrx_block_forward.1} parent=1 // pred_check
      _
    $region3: #{dbrx_block_forward.1} parent=1 // pred_check_branch
      %24 = sbr.rel (0) target = $region5
    $region4: #{dbrx_block_forward.1} parent=1 // pred_region
      _
    $region5: #{dbrx_block_forward.1} parent=1 // pred_fallthru
      _
    // Predicated region
    $region6: #{dbrx_block_forward.1} parent=1 // pred_check
      _
    $region7: #{dbrx_block_forward.1} parent=1 // pred_check_branch
      %26 = sbr.rel (0) target = $region9
    $region8: #{dbrx_block_forward.1} parent=1 // pred_region
      _
    $region9: #{dbrx_block_forward.1} parent=1 // pred_fallthru
      _
    // Predicated region
    $region10: #{dbrx_block_forward.1} parent=1 // pred_check
      _
    $region11: #{dbrx_block_forward.1} parent=1 // pred_check_branch
      %28 = sbr.rel (0) target = $region13
    $region12: #{dbrx_block_forward.1} parent=1 // pred_region
      _
    $region13: #{dbrx_block_forward.1} parent=1 // pred_fallthru
      _
    // Predicated region
    $region14: #{dbrx_block_forward.1} parent=1 // pred_check
      _
    $region15: #{dbrx_block_forward.1} parent=1 // pred_check_branch
      %30 = sbr.rel (0) target = $region17
    $region16: #{dbrx_block_forward.1} parent=1 // pred_region
      _
    $region17: #{dbrx_block_forward.1} parent=1 // pred_fallthru
      _
    // Predicated region
    $region18: #{dbrx_block_forward.1} parent=1 // pred_check
      _
    $region19: #{dbrx_block_forward.1} parent=1 // pred_check_branch
      %32 = sbr.rel (0) target = $region21
    $region20: #{dbrx_block_forward.1} parent=1 // pred_region
      _
    $region21: #{dbrx_block_forward.1} parent=1 // pred_fallthru
      _
    // Predicated region
    $region22: #{dbrx_block_forward.1} parent=1 // pred_check
      _
    $region23: #{dbrx_block_forward.1} parent=1 // pred_check_branch
      %34 = sbr.rel (0) target = $region25
    $region24: #{dbrx_block_forward.1} parent=1 // pred_region
      _
    $region25: #{dbrx_block_forward.1} parent=1 // pred_fallthru
      _
    // Predicated region
    $region26: #{dbrx_block_forward.1} parent=1 // pred_check
      _
    $region27: #{dbrx_block_forward.1} parent=1 // pred_check_branch
      %36 = sbr.rel (0) target = $region29
    $region28: #{dbrx_block_forward.1} parent=1 // pred_region
      _
    $region29: #{dbrx_block_forward.1} parent=1 // pred_fallthru
      _
    // Predicated region
    $region30: #{dbrx_block_forward.1} parent=1 // pred_check
      _
    $region31: #{dbrx_block_forward.1} parent=1 // pred_check_branch
      %38 = sbr.rel (0) target = $region33
    $region32: #{dbrx_block_forward.1} parent=1 // pred_region
      _
    $region33: #{dbrx_block_forward.1} parent=1 // pred_fallthru
      _
    // Predicated region
    $region34: #{dbrx_block_forward.1} parent=1 // pred_check
      _
    $region35: #{dbrx_block_forward.1} parent=1 // pred_check_branch
      %40 = sbr.rel (0) target = $region37
    $region36: #{dbrx_block_forward.1} parent=1 // pred_region
      _
    $region37: #{dbrx_block_forward.1} parent=1 // pred_fallthru
      _
    // Predicated region
    $region38: #{dbrx_block_forward.1} parent=1 // pred_check
      _
    $region39: #{dbrx_block_forward.1} parent=1 // pred_check_branch
      %42 = sbr.rel (0) target = $region41
    $region40: #{dbrx_block_forward.1} parent=1 // pred_region
      _
    $region41: #{dbrx_block_forward.1} parent=1 // pred_fallthru
      _
    // Predicated region
    $region42: #{dbrx_block_forward.1} parent=1 // pred_check
      _
    $region43: #{dbrx_block_forward.1} parent=1 // pred_check_branch
      %44 = sbr.rel (0) target = $region45
    $region44: #{dbrx_block_forward.1} parent=1 // pred_region
      _
    $region45: #{dbrx_block_forward.1} parent=1 // pred_fallthru
      _
    // Predicated region
    $region46: #{dbrx_block_forward.1} parent=1 // pred_check
      _
    $region47: #{dbrx_block_forward.1} parent=1 // pred_check_branch
      %46 = sbr.rel (0) target = $region49
    $region48: #{dbrx_block_forward.1} parent=1 // pred_region
      _
    $region49: #{dbrx_block_forward.1} parent=1 // pred_fallthru
      _
    // Predicated region
    $region50: #{dbrx_block_forward.1} parent=1 // pred_check
      _
    $region51: #{dbrx_block_forward.1} parent=1 // pred_check_branch
      %48 = sbr.rel (0) target = $region53
    $region52: #{dbrx_block_forward.1} parent=1 // pred_region
      _
    $region53: #{dbrx_block_forward.1} parent=1 // pred_fallthru
      _
    // Predicated region
    $region54: #{dbrx_block_forward.1} parent=1 // pred_check
      _
    $region55: #{dbrx_block_forward.1} parent=1 // pred_check_branch
      %50 = sbr.rel (0) target = $region57
    $region56: #{dbrx_block_forward.1} parent=1 // pred_region
      _
    $region57: #{dbrx_block_forward.1} parent=1 // pred_fallthru
      _
    // Predicated region
    $region58: #{dbrx_block_forward.1} parent=1 // pred_check
      _
    $region59: #{dbrx_block_forward.1} parent=1 // pred_check_branch
      %52 = sbr.rel (0) target = $region61
    $region60: #{dbrx_block_forward.1} parent=1 // pred_region
      _
    $region61: #{dbrx_block_forward.1} parent=1 // pred_fallthru
      _
    // Predicated region
    $region62: #{dbrx_block_forward.1} parent=1 // pred_check
      _
    $region63: #{dbrx_block_forward.1} parent=1 // pred_check_branch
      %54 = sbr.rel (0) target = $region65
    $region64: #{dbrx_block_forward.1} parent=1 // pred_region
      _
    $region65: #{dbrx_block_forward.1} parent=1 // pred_fallthru
      _
    // Predicated region
    $region66: #{dbrx_block_forward.1} parent=1 // pred_check
      _
    $region67: #{dbrx_block_forward.1} parent=1 // pred_check_branch
      %56 = sbr.rel (0) target = $region69
    $region68: #{dbrx_block_forward.1} parent=1 // pred_region
      _
    $region69: #{dbrx_block_forward.1} parent=1 // pred_fallthru
      _
    %v58 = vld [vmem:[%s0] sm:$0xff]
    %v59 = vld [vmem:[%s0 + $0x8] sm:$0xff]
    %v60 = vld [vmem:[%s1] sm:$0x1]
    %v61 = vld [vmem:[%s2] sm:$0x1]
    %vm62 = vcmask 261120
    %v63 = vsel %vm62, %v58, 0.0
    %64 = vadd.xlane.f32.xlu0 %v63
    %v65 = vpop.xlane.xlu0 %64
    %v66 = vsel %vm62, %v59, 0.0
    %67 = vadd.xlane.f32.xlu0 %v66
    %v68 = vpop.xlane.xlu0 %67
    %v69 = vrcp.pop 32.0
    %v70 = vmul.f32 32.0, %v69
    %v71 = vsub.f32 1.0, %v70
    %v72 = vmul.f32 %v69, %v71
    %v73 = vadd.f32 %v69, %v72
    %vm74 = vweird.f32 %v69
    %v75 = vsel %vm74, %v69, %v73
    %v76 = vmul.f32 %v65, %v75
    %v77 = vmul.f32 %v68, %v75
    %v78 = vsub.f32 %v58, %v76
    %v79 = vsub.f32 %v59, %v77
    %v80 = vmul.f32 %v78, %v78
    %v81 = vmul.f32 %v79, %v79
    %v82 = vsel %vm62, %v80, 0.0
    %83 = vadd.xlane.f32.xlu0 %v82
    %v84 = vpop.xlane.xlu0 %83
    %v85 = vsel %vm62, %v81, 0.0
    %86 = vadd.xlane.f32.xlu0 %v85
    %v87 = vpop.xlane.xlu0 %86
    %v88 = vmul.f32 %v84, %v75
    %v89 = vmul.f32 %v87, %v75
    %v90 = vadd.f32 %v88, 1e-05
    %v91 = vadd.f32 %v89, 1e-05
    %v92 = vrsqrt.pop %v90
    %v93 = vmul.f32 %v92, %v90
    %v94 = vmul.f32 %v93, %v92
    %v95 = vmul.f32 0.5, %v94
    %v96 = vsub.f32 1.5, %v95
    %v97 = vmul.f32 %v92, %v96
    %vm98 = vweird.f32 %v90
    %vm99 = vweird.f32 %v92
    %vm100 = vmor %vm98, %vm99
    %v101 = vsel %vm100, %v92, %v97
    %v102 = vrsqrt.pop %v91
    %v103 = vmul.f32 %v102, %v91
    %v104 = vmul.f32 %v103, %v102
    %v105 = vmul.f32 0.5, %v104
    %v106 = vsub.f32 1.5, %v105
    %v107 = vmul.f32 %v102, %v106
    %vm108 = vweird.f32 %v91
    %vm109 = vweird.f32 %v102
    %vm110 = vmor %vm108, %vm109
    %v111 = vsel %vm110, %v102, %v107
    %v112 = vmul.f32 %v78, %v101
    %v113 = vmul.f32 %v79, %v111
    %v115 = vperm.slane %v60, 0
    %v117 = vmul.f32 %v112, %v115
    %v118 = vmul.f32 %v113, %v115
    %v120 = vperm.slane %v61, 0
    %v122 = vadd.f32 %v117, %v120
    %v123 = vadd.f32 %v118, %v120
    %v124 = vpack.c.bf16 %v123, %v122
    %v125 = vld [vmem:[%s13] sm:$0xff]
    %v126 = vld [vmem:[%s13 + $0x8] sm:$0xff]
    %v127 = vld [vmem:[%s14] sm:$0xff]
    %v128 = vld [vmem:[%s14 + $0x8] sm:$0xff]
    %v129 = vld [vmem:[%s15] sm:$0xf]
    %v130 = vld [vmem:[%s6] sm:$0xf]
    %v131 = vld [vmem:[%s6 + $0x4] sm:$0xf]
    %v132 = vld [vmem:[%s6 + $0x8] sm:$0xf]
    %v133 = vld [vmem:[%s6 + $0xc] sm:$0xf]
    %v138 = vunpack.c.l.b16 %v130
    %v139 = vunpack.c.l.b16 %v131
    %v140 = vunpack.c.l.b16 %v132
    %v141 = vunpack.c.l.b16 %v133
    %v142 = vpack.c.b16 %v139, %v138
    %v143 = vpack.c.b16 %v141, %v140
    %v147 = vsel %vm62, %v124, 0
    %149 = vmatpush.bf16.msra.mxu0 0
    %150 = vmatpush.bf16.msra.mxu0 0
    %151 = vmatpush.bf16.msra.mxu0 0
    %152 = vmatpush.bf16.msra.mxu0 0
    %153 = vmatpush.bf16.msra.mxu0 0
    %154 = vmatpush.bf16.msra.mxu0 0
    %155 = vmatpush.bf16.msra.mxu0 %v143
    %156 = vmatpush.bf16.msra.mxu0 %v142
    %157 = vmatmul.bf16.gmra.mxu0 %v147
    %v158 = vpop.f32.mrf.mxu0
    %v159 = vadd.f32 0.0, %v158
    %v160 = vpop.f32.mrf.mxu0
    %v161 = vadd.f32 0.0, %v160
    %162 = vdwg.mxu0
    %v163 = vmax.f32 %v159, -8.0
    %v164 = vmax.f32 %v161, -8.0
    %v165 = vmin.f32 %v163, 8.0
    %v166 = vmin.f32 %v164, 8.0
    %v167 = vld [vmem:[%s7] sm:$0xf]
    %v168 = vld [vmem:[%s7 + $0x4] sm:$0xf]
    %v169 = vld [vmem:[%s7 + $0x8] sm:$0xf]
    %v170 = vld [vmem:[%s7 + $0xc] sm:$0xf]
    %v175 = vunpack.c.l.b16 %v167
    %v176 = vunpack.c.l.b16 %v168
    %v177 = vunpack.c.l.b16 %v169
    %v178 = vunpack.c.l.b16 %v170
    %v179 = vpack.c.b16 %v176, %v175
    %v180 = vpack.c.b16 %v178, %v177
    %183 = vmatpush.bf16.msra.mxu0 0
    %184 = vmatpush.bf16.msra.mxu0 0
    %185 = vmatpush.bf16.msra.mxu0 0
    %186 = vmatpush.bf16.msra.mxu0 0
    %187 = vmatpush.bf16.msra.mxu0 0
    %188 = vmatpush.bf16.msra.mxu0 0
    %189 = vmatpush.bf16.msra.mxu0 %v180
    %190 = vmatpush.bf16.msra.mxu0 %v179
    %191 = vmatmul.bf16.gmra.mxu0 %v147
    %v192 = vpop.f32.mrf.mxu0
    %v193 = vadd.f32 0.0, %v192
    %v194 = vpop.f32.mrf.mxu0
    %v195 = vadd.f32 0.0, %v194
    %196 = vdwg.mxu0
    %v197 = vmax.f32 %v193, -8.0
    %v198 = vmax.f32 %v195, -8.0
    %v199 = vmin.f32 %v197, 8.0
    %v200 = vmin.f32 %v198, 8.0
    %v201 = vpack.c.bf16 %v166, %v165
    %vm202 = vcmask 64512
    %v204 = vsel %vm202, %v201, 0
    %vm206 = vcmask 1043456
    %v208 = vsel %vm206, %v129, 0
    %210 = vmatpush.bf16.msra.mxu0 0
    %211 = vmatpush.bf16.msra.mxu0 0
    %212 = vmatpush.bf16.msra.mxu0 0
    %213 = vmatpush.bf16.msra.mxu0 0
    %214 = vmatpush.bf16.msra.mxu0 0
    %215 = vmatpush.bf16.msra.mxu0 0
    %216 = vmatpush.bf16.msra.mxu0 0
    %217 = vmatpush.bf16.msra.mxu0 %v208
    %218 = vmatmul.bf16.gmra.mxu0 %v204
    %v219 = vpop.f32.mrf.mxu0
    %v220 = vadd.f32 0.0, %v219
    %v221 = vpop.f32.mrf.mxu0
    %v222 = vadd.f32 0.0, %v221
    %223 = vdwg.mxu0
    %v224 = vmul.f32 %v165, %v125
    %v225 = vmul.f32 %v166, %v126
    %v226 = vmul.f32 %v220, %v127
    %v227 = vmul.f32 %v222, %v128
    %v228 = vadd.f32 %v224, %v226
    %v229 = vadd.f32 %v225, %v227
    %v230 = vpack.c.bf16 %v229, %v228
    %v231 = vpack.c.bf16 %v200, %v199
    %s232 = scalar_lea.vmem %s6, 16
    %v233 = vld [vmem:[%s232] sm:$0xf]
    %v234 = vld [vmem:[%s232 + $0x4] sm:$0xf]
    %v235 = vld [vmem:[%s232 + $0x8] sm:$0xf]
    %v236 = vld [vmem:[%s232 + $0xc] sm:$0xf]
    %v241 = vunpack.c.l.b16 %v233
    %v242 = vunpack.c.l.b16 %v234
    %v243 = vunpack.c.l.b16 %v235
    %v244 = vunpack.c.l.b16 %v236
    %v245 = vpack.c.b16 %v242, %v241
    %v246 = vpack.c.b16 %v244, %v243
    %249 = vmatpush.bf16.msra.mxu0 0
    %250 = vmatpush.bf16.msra.mxu0 0
    %251 = vmatpush.bf16.msra.mxu0 0
    %252 = vmatpush.bf16.msra.mxu0 0
    %253 = vmatpush.bf16.msra.mxu0 0
    %254 = vmatpush.bf16.msra.mxu0 0
    %255 = vmatpush.bf16.msra.mxu0 %v246
    %256 = vmatpush.bf16.msra.mxu0 %v245
    %257 = vmatmul.bf16.gmra.mxu0 %v147
    %v258 = vpop.f32.mrf.mxu0
    %v259 = vadd.f32 0.0, %v258
    %v260 = vpop.f32.mrf.mxu0
    %v261 = vadd.f32 0.0, %v260
    %262 = vdwg.mxu0
    %v263 = vmax.f32 %v259, -8.0
    %v264 = vmax.f32 %v261, -8.0
    %v265 = vmin.f32 %v263, 8.0
    %v266 = vmin.f32 %v264, 8.0
    %s267 = scalar_lea.vmem %s7, 16
    %v268 = vld [vmem:[%s267] sm:$0xf]
    %v269 = vld [vmem:[%s267 + $0x4] sm:$0xf]
    %v270 = vld [vmem:[%s267 + $0x8] sm:$0xf]
    %v271 = vld [vmem:[%s267 + $0xc] sm:$0xf]
    %v276 = vunpack.c.l.b16 %v268
    %v277 = vunpack.c.l.b16 %v269
    %v278 = vunpack.c.l.b16 %v270
    %v279 = vunpack.c.l.b16 %v271
    %v280 = vpack.c.b16 %v277, %v276
    %v281 = vpack.c.b16 %v279, %v278
    %284 = vmatpush.bf16.msra.mxu0 0
    %285 = vmatpush.bf16.msra.mxu0 0
    %286 = vmatpush.bf16.msra.mxu0 0
    %287 = vmatpush.bf16.msra.mxu0 0
    %288 = vmatpush.bf16.msra.mxu0 0
    %289 = vmatpush.bf16.msra.mxu0 0
    %290 = vmatpush.bf16.msra.mxu0 %v281
    %291 = vmatpush.bf16.msra.mxu0 %v280
    %292 = vmatmul.bf16.gmra.mxu0 %v147
    %v293 = vpop.f32.mrf.mxu0
    %v294 = vadd.f32 0.0, %v293
    %v295 = vpop.f32.mrf.mxu0
    %v296 = vadd.f32 0.0, %v295
    %297 = vdwg.mxu0
    %v298 = vmax.f32 %v294, -8.0
    %v299 = vmax.f32 %v296, -8.0
    %v300 = vmin.f32 %v298, 8.0
    %v301 = vmin.f32 %v299, 8.0
    %v302 = vpack.c.bf16 %v266, %v265
    %v304 = vsel %vm202, %v302, 0
    %306 = vmatpush.bf16.msra.mxu0 0
    %307 = vmatpush.bf16.msra.mxu0 0
    %308 = vmatpush.bf16.msra.mxu0 0
    %309 = vmatpush.bf16.msra.mxu0 0
    %310 = vmatpush.bf16.msra.mxu0 0
    %311 = vmatpush.bf16.msra.mxu0 0
    %312 = vmatpush.bf16.msra.mxu0 0
    %313 = vmatpush.bf16.msra.mxu0 %v208
    %314 = vmatmul.bf16.gmra.mxu0 %v304
    %v315 = vpop.f32.mrf.mxu0
    %v316 = vadd.f32 0.0, %v315
    %v317 = vpop.f32.mrf.mxu0
    %v318 = vadd.f32 0.0, %v317
    %319 = vdwg.mxu0
    %v320 = vmul.f32 %v265, %v125
    %v321 = vmul.f32 %v266, %v126
    %v322 = vmul.f32 %v316, %v127
    %v323 = vmul.f32 %v318, %v128
    %v324 = vadd.f32 %v320, %v322
    %v325 = vadd.f32 %v321, %v323
    %v326 = vpack.c.bf16 %v325, %v324
    %v327 = vpack.c.bf16 %v301, %v300
    %v328 = vld [vmem:[%s16] sm:$0xff]
    %v329 = vld [vmem:[%s16 + $0x8] sm:$0xff]
    %v330 = vld [vmem:[%s5] sm:$0xf]
    %v331 = vld [vmem:[%s5 + $0x4] sm:$0xf]
    %v332 = vld [vmem:[%s5 + $0x8] sm:$0xf]
    %v333 = vld [vmem:[%s5 + $0xc] sm:$0xf]
    %v338 = vunpack.c.l.b16 %v330
    %v339 = vunpack.c.l.b16 %v331
    %v340 = vunpack.c.l.b16 %v332
    %v341 = vunpack.c.l.b16 %v333
    %v342 = vpack.c.b16 %v339, %v338
    %v343 = vpack.c.b16 %v341, %v340
    %346 = vmatpush.bf16.msra.mxu0 0
    %347 = vmatpush.bf16.msra.mxu0 0
    %348 = vmatpush.bf16.msra.mxu0 0
    %349 = vmatpush.bf16.msra.mxu0 0
    %350 = vmatpush.bf16.msra.mxu0 0
    %351 = vmatpush.bf16.msra.mxu0 0
    %352 = vmatpush.bf16.msra.mxu0 %v343
    %353 = vmatpush.bf16.msra.mxu0 %v342
    %354 = vmatmul.bf16.gmra.mxu0 %v147
    %v355 = vpop.f32.mrf.mxu0
    %v356 = vadd.f32 0.0, %v355
    %v357 = vpop.f32.mrf.mxu0
    %v358 = vadd.f32 0.0, %v357
    %359 = vdwg.mxu0
    %v360 = vmax.f32 %v356, -8.0
    %v361 = vmax.f32 %v358, -8.0
    %v362 = vmin.f32 %v360, 8.0
    %v363 = vmin.f32 %v361, 8.0
    %v364 = vpack.c.bf16 %v363, %v362
    %v366 = vsel %vm202, %v364, 0
    %368 = vmatpush.bf16.msra.mxu0 0
    %369 = vmatpush.bf16.msra.mxu0 0
    %370 = vmatpush.bf16.msra.mxu0 0
    %371 = vmatpush.bf16.msra.mxu0 0
    %372 = vmatpush.bf16.msra.mxu0 0
    %373 = vmatpush.bf16.msra.mxu0 0
    %374 = vmatpush.bf16.msra.mxu0 0
    %375 = vmatpush.bf16.msra.mxu0 %v208
    %376 = vmatmul.bf16.gmra.mxu0 %v366
    %v377 = vpop.f32.mrf.mxu0
    %v378 = vadd.f32 0.0, %v377
    %v379 = vpop.f32.mrf.mxu0
    %v380 = vadd.f32 0.0, %v379
    %381 = vdwg.mxu0
    %v382 = vmul.f32 %v362, %v125
    %v383 = vmul.f32 %v363, %v126
    %v384 = vmul.f32 %v378, %v127
    %v385 = vmul.f32 %v380, %v128
    %v386 = vadd.f32 %v382, %v384
    %v387 = vadd.f32 %v383, %v385
    %v388 = vpack.c.bf16 %v387, %v386
    %v390 = vsel %vm202, %v388, 0
    %v393 = vsel %vm202, %v230, 0
    %395 = vmatpush.bf16.xpose.msra.mxu0 0
    %396 = vmatpush.bf16.xpose.msra.mxu0 0
    %397 = vmatpush.bf16.xpose.msra.mxu0 0
    %398 = vmatpush.bf16.xpose.msra.mxu0 0
    %399 = vmatpush.bf16.xpose.msra.mxu0 0
    %400 = vmatpush.bf16.xpose.msra.mxu0 0
    %401 = vmatpush.bf16.xpose.msra.mxu0 0
    %402 = vmatpush.bf16.xpose.msra.mxu0 %v393
    %403 = vmatmul.bf16.gmra.mxu0 %v390
    %v404 = vpop.f32.mrf.mxu0
    %v405 = vadd.f32 0.0, %v404
    %v406 = vpop.f32.mrf.mxu0
    %v407 = vadd.f32 0.0, %v406
    %408 = vdwg.mxu0
    %v409 = vmul.f32 %v405, 0.35355338
    %v410 = vmul.f32 %v407, 0.35355338
    %v411 = vadd.f32 %v409, %v328
    %v412 = vadd.f32 %v410, %v329
    %vm413 = vcmask 130048
    %v414 = vsel %vm413, %v411, -inf
    %415 = vmax.xlane.f32.xlu0 %v414
    %v416 = vpop.xlane.xlu0 %415
    %v417 = vsel %vm413, %v412, -inf
    %418 = vmax.xlane.f32.xlu0 %v417
    %v419 = vpop.xlane.xlu0 %418
    %v420 = vsub.f32 %v411, %v416
    %v421 = vsub.f32 %v412, %v419
    %v422 = vmul.f32 %v420, 1.442695
    %v423 = vpow.pop %v422
    %v424 = vmul.f32 %v421, 1.442695
    %v425 = vpow.pop %v424
    %v426 = vsel %vm413, %v423, 0.0
    %427 = vadd.xlane.f32.xlu0 %v426
    %v428 = vpop.xlane.xlu0 %427
    %v429 = vsel %vm413, %v425, 0.0
    %430 = vadd.xlane.f32.xlu0 %v429
    %v431 = vpop.xlane.xlu0 %430
    %v432 = vrcp.pop %v428
    %v433 = vrcp.pop %v431
    %v434 = vmul.f32 %v423, %v432
    %v435 = vmul.f32 %v425, %v433
    %v436 = vpack.c.bf16 %v435, %v434
    %v438 = vsel %vm413, %v436, 0
    %440 = vmatpush.bf16.msra.mxu0 0
    %441 = vmatpush.bf16.msra.mxu0 0
    %442 = vmatpush.bf16.msra.mxu0 0
    %443 = vmatpush.bf16.msra.mxu0 0
    %444 = vmatpush.bf16.msra.mxu0 0
    %445 = vmatpush.bf16.msra.mxu0 0
    %446 = vmatpush.bf16.msra.mxu0 0
    %447 = vmatpush.bf16.msra.mxu0 %v231
    %448 = vmatmul.bf16.gmra.mxu0 %v438
    %v449 = vpop.f32.mrf.mxu0
    %v450 = vadd.f32 0.0, %v449
    %v451 = vpop.f32.mrf.mxu0
    %v452 = vadd.f32 0.0, %v451
    %453 = vdwg.mxu0
    %v454 = vpack.c.bf16 %v452, %v450
    %v455 = vld [vmem:[%s8] sm:$0xf]
    %s456 = scalar_lea.vmem %s5, 16
    %v457 = vld [vmem:[%s456] sm:$0xf]
    %v458 = vld [vmem:[%s456 + $0x4] sm:$0xf]
    %v459 = vld [vmem:[%s456 + $0x8] sm:$0xf]
    %v460 = vld [vmem:[%s456 + $0xc] sm:$0xf]
    %v465 = vunpack.c.l.b16 %v457
    %v466 = vunpack.c.l.b16 %v458
    %v467 = vunpack.c.l.b16 %v459
    %v468 = vunpack.c.l.b16 %v460
    %v469 = vpack.c.b16 %v466, %v465
    %v470 = vpack.c.b16 %v468, %v467
    %473 = vmatpush.bf16.msra.mxu0 0
    %474 = vmatpush.bf16.msra.mxu0 0
    %475 = vmatpush.bf16.msra.mxu0 0
    %476 = vmatpush.bf16.msra.mxu0 0
    %477 = vmatpush.bf16.msra.mxu0 0
    %478 = vmatpush.bf16.msra.mxu0 0
    %479 = vmatpush.bf16.msra.mxu0 %v470
    %480 = vmatpush.bf16.msra.mxu0 %v469
    %481 = vmatmul.bf16.gmra.mxu0 %v147
    %v482 = vpop.f32.mrf.mxu0
    %v483 = vadd.f32 0.0, %v482
    %v484 = vpop.f32.mrf.mxu0
    %v485 = vadd.f32 0.0, %v484
    %486 = vdwg.mxu0
    %v487 = vmax.f32 %v483, -8.0
    %v488 = vmax.f32 %v485, -8.0
    %v489 = vmin.f32 %v487, 8.0
    %v490 = vmin.f32 %v488, 8.0
    %v491 = vpack.c.bf16 %v490, %v489
    %v493 = vsel %vm202, %v491, 0
    %495 = vmatpush.bf16.msra.mxu0 0
    %496 = vmatpush.bf16.msra.mxu0 0
    %497 = vmatpush.bf16.msra.mxu0 0
    %498 = vmatpush.bf16.msra.mxu0 0
    %499 = vmatpush.bf16.msra.mxu0 0
    %500 = vmatpush.bf16.msra.mxu0 0
    %501 = vmatpush.bf16.msra.mxu0 0
    %502 = vmatpush.bf16.msra.mxu0 %v208
    %503 = vmatmul.bf16.gmra.mxu0 %v493
    %v504 = vpop.f32.mrf.mxu0
    %v505 = vadd.f32 0.0, %v504
    %v506 = vpop.f32.mrf.mxu0
    %v507 = vadd.f32 0.0, %v506
    %508 = vdwg.mxu0
    %v509 = vmul.f32 %v489, %v125
    %v510 = vmul.f32 %v490, %v126
    %v511 = vmul.f32 %v505, %v127
    %v512 = vmul.f32 %v507, %v128
    %v513 = vadd.f32 %v509, %v511
    %v514 = vadd.f32 %v510, %v512
    %v515 = vpack.c.bf16 %v514, %v513
    %v517 = vsel %vm202, %v515, 0
    %519 = vmatpush.bf16.xpose.msra.mxu0 0
    %520 = vmatpush.bf16.xpose.msra.mxu0 0
    %521 = vmatpush.bf16.xpose.msra.mxu0 0
    %522 = vmatpush.bf16.xpose.msra.mxu0 0
    %523 = vmatpush.bf16.xpose.msra.mxu0 0
    %524 = vmatpush.bf16.xpose.msra.mxu0 0
    %525 = vmatpush.bf16.xpose.msra.mxu0 0
    %526 = vmatpush.bf16.xpose.msra.mxu0 %v393
    %527 = vmatmul.bf16.gmra.mxu0 %v517
    %v528 = vpop.f32.mrf.mxu0
    %v529 = vadd.f32 0.0, %v528
    %v530 = vpop.f32.mrf.mxu0
    %v531 = vadd.f32 0.0, %v530
    %532 = vdwg.mxu0
    %v533 = vmul.f32 %v529, 0.35355338
    %v534 = vmul.f32 %v531, 0.35355338
    %v535 = vadd.f32 %v533, %v328
    %v536 = vadd.f32 %v534, %v329
    %v537 = vsel %vm413, %v535, -inf
    %538 = vmax.xlane.f32.xlu0 %v537
    %v539 = vpop.xlane.xlu0 %538
    %v540 = vsel %vm413, %v536, -inf
    %541 = vmax.xlane.f32.xlu0 %v540
    %v542 = vpop.xlane.xlu0 %541
    %v543 = vsub.f32 %v535, %v539
    %v544 = vsub.f32 %v536, %v542
    %v545 = vmul.f32 %v543, 1.442695
    %v546 = vpow.pop %v545
    %v547 = vmul.f32 %v544, 1.442695
    %v548 = vpow.pop %v547
    %v549 = vsel %vm413, %v546, 0.0
    %550 = vadd.xlane.f32.xlu0 %v549
    %v551 = vpop.xlane.xlu0 %550
    %v552 = vsel %vm413, %v548, 0.0
    %553 = vadd.xlane.f32.xlu0 %v552
    %v554 = vpop.xlane.xlu0 %553
    %v555 = vrcp.pop %v551
    %v556 = vrcp.pop %v554
    %v557 = vmul.f32 %v546, %v555
    %v558 = vmul.f32 %v548, %v556
    %v559 = vpack.c.bf16 %v558, %v557
    %v561 = vsel %vm413, %v559, 0
    %563 = vmatpush.bf16.msra.mxu0 0
    %564 = vmatpush.bf16.msra.mxu0 0
    %565 = vmatpush.bf16.msra.mxu0 0
    %566 = vmatpush.bf16.msra.mxu0 0
    %567 = vmatpush.bf16.msra.mxu0 0
    %568 = vmatpush.bf16.msra.mxu0 0
    %569 = vmatpush.bf16.msra.mxu0 0
    %570 = vmatpush.bf16.msra.mxu0 %v231
    %571 = vmatmul.bf16.gmra.mxu0 %v561
    %v572 = vpop.f32.mrf.mxu0
    %v573 = vadd.f32 0.0, %v572
    %v574 = vpop.f32.mrf.mxu0
    %v575 = vadd.f32 0.0, %v574
    %576 = vdwg.mxu0
    %v577 = vpack.c.bf16 %v575, %v573
    %s578 = scalar_lea.vmem %s8, 4
    %v579 = vld [vmem:[%s578] sm:$0xf]
    %v581 = vsel %vm202, %v577, 0
    %v584 = vsel %vm206, %v579, 0
    %586 = vmatpush.bf16.msra.mxu0 0
    %587 = vmatpush.bf16.msra.mxu0 0
    %588 = vmatpush.bf16.msra.mxu0 0
    %589 = vmatpush.bf16.msra.mxu0 0
    %590 = vmatpush.bf16.msra.mxu0 0
    %591 = vmatpush.bf16.msra.mxu0 0
    %592 = vmatpush.bf16.msra.mxu0 0
    %593 = vmatpush.bf16.msra.mxu0 %v584
    %594 = vmatmul.bf16.gmra.mxu0 %v581
    %v595 = vpop.f32.mrf.mxu0
    %v596 = vadd.f32 0.0, %v595
    %v597 = vpop.f32.mrf.mxu0
    %v598 = vadd.f32 0.0, %v597
    %599 = vdwg.mxu0
    %v601 = vsel %vm202, %v454, 0
    %v604 = vsel %vm206, %v455, 0
    %606 = vmatpush.bf16.msra.mxu0 0
    %607 = vmatpush.bf16.msra.mxu0 0
    %608 = vmatpush.bf16.msra.mxu0 0
    %609 = vmatpush.bf16.msra.mxu0 0
    %610 = vmatpush.bf16.msra.mxu0 0
    %611 = vmatpush.bf16.msra.mxu0 0
    %612 = vmatpush.bf16.msra.mxu0 0
    %613 = vmatpush.bf16.msra.mxu0 %v604
    %614 = vmatmul.bf16.gmra.mxu0 %v601
    %v615 = vpop.f32.mrf.mxu0
    %v616 = vadd.f32 %v596, %v615
    %v617 = vpop.f32.mrf.mxu0
    %v618 = vadd.f32 %v598, %v617
    %619 = vdwg.mxu0
    %s620 = scalar_lea.vmem %s5, 32
    %v621 = vld [vmem:[%s620] sm:$0xf]
    %v622 = vld [vmem:[%s620 + $0x4] sm:$0xf]
    %v623 = vld [vmem:[%s620 + $0x8] sm:$0xf]
    %v624 = vld [vmem:[%s620 + $0xc] sm:$0xf]
    %v629 = vunpack.c.l.b16 %v621
    %v630 = vunpack.c.l.b16 %v622
    %v631 = vunpack.c.l.b16 %v623
    %v632 = vunpack.c.l.b16 %v624
    %v633 = vpack.c.b16 %v630, %v629
    %v634 = vpack.c.b16 %v632, %v631
    %637 = vmatpush.bf16.msra.mxu0 0
    %638 = vmatpush.bf16.msra.mxu0 0
    %639 = vmatpush.bf16.msra.mxu0 0
    %640 = vmatpush.bf16.msra.mxu0 0
    %641 = vmatpush.bf16.msra.mxu0 0
    %642 = vmatpush.bf16.msra.mxu0 0
    %643 = vmatpush.bf16.msra.mxu0 %v634
    %644 = vmatpush.bf16.msra.mxu0 %v633
    %645 = vmatmul.bf16.gmra.mxu0 %v147
    %v646 = vpop.f32.mrf.mxu0
    %v647 = vadd.f32 0.0, %v646
    %v648 = vpop.f32.mrf.mxu0
    %v649 = vadd.f32 0.0, %v648
    %650 = vdwg.mxu0
    %v651 = vmax.f32 %v647, -8.0
    %v652 = vmax.f32 %v649, -8.0
    %v653 = vmin.f32 %v651, 8.0
    %v654 = vmin.f32 %v652, 8.0
    %v655 = vpack.c.bf16 %v654, %v653
    %v657 = vsel %vm202, %v655, 0
    %659 = vmatpush.bf16.msra.mxu0 0
    %660 = vmatpush.bf16.msra.mxu0 0
    %661 = vmatpush.bf16.msra.mxu0 0
    %662 = vmatpush.bf16.msra.mxu0 0
    %663 = vmatpush.bf16.msra.mxu0 0
    %664 = vmatpush.bf16.msra.mxu0 0
    %665 = vmatpush.bf16.msra.mxu0 0
    %666 = vmatpush.bf16.msra.mxu0 %v208
    %667 = vmatmul.bf16.gmra.mxu0 %v657
    %v668 = vpop.f32.mrf.mxu0
    %v669 = vadd.f32 0.0, %v668
    %v670 = vpop.f32.mrf.mxu0
    %v671 = vadd.f32 0.0, %v670
    %672 = vdwg.mxu0
    %v673 = vmul.f32 %v653, %v125
    %v674 = vmul.f32 %v654, %v126
    %v675 = vmul.f32 %v669, %v127
    %v676 = vmul.f32 %v671, %v128
    %v677 = vadd.f32 %v673, %v675
    %v678 = vadd.f32 %v674, %v676
    %v679 = vpack.c.bf16 %v678, %v677
    %v681 = vsel %vm202, %v679, 0
    %v684 = vsel %vm202, %v326, 0
    %686 = vmatpush.bf16.xpose.msra.mxu0 0
    %687 = vmatpush.bf16.xpose.msra.mxu0 0
    %688 = vmatpush.bf16.xpose.msra.mxu0 0
    %689 = vmatpush.bf16.xpose.msra.mxu0 0
    %690 = vmatpush.bf16.xpose.msra.mxu0 0
    %691 = vmatpush.bf16.xpose.msra.mxu0 0
    %692 = vmatpush.bf16.xpose.msra.mxu0 0
    %693 = vmatpush.bf16.xpose.msra.mxu0 %v684
    %694 = vmatmul.bf16.gmra.mxu0 %v681
    %v695 = vpop.f32.mrf.mxu0
    %v696 = vadd.f32 0.0, %v695
    %v697 = vpop.f32.mrf.mxu0
    %v698 = vadd.f32 0.0, %v697
    %699 = vdwg.mxu0
    %v700 = vmul.f32 %v696, 0.35355338
    %v701 = vmul.f32 %v698, 0.35355338
    %v702 = vadd.f32 %v700, %v328
    %v703 = vadd.f32 %v701, %v329
    %v704 = vsel %vm413, %v702, -inf
    %705 = vmax.xlane.f32.xlu0 %v704
    %v706 = vpop.xlane.xlu0 %705
    %v707 = vsel %vm413, %v703, -inf
    %708 = vmax.xlane.f32.xlu0 %v707
    %v709 = vpop.xlane.xlu0 %708
    %v710 = vsub.f32 %v702, %v706
    %v711 = vsub.f32 %v703, %v709
    %v712 = vmul.f32 %v710, 1.442695
    %v713 = vpow.pop %v712
    %v714 = vmul.f32 %v711, 1.442695
    %v715 = vpow.pop %v714
    %v716 = vsel %vm413, %v713, 0.0
    %717 = vadd.xlane.f32.xlu0 %v716
    %v718 = vpop.xlane.xlu0 %717
    %v719 = vsel %vm413, %v715, 0.0
    %720 = vadd.xlane.f32.xlu0 %v719
    %v721 = vpop.xlane.xlu0 %720
    %v722 = vrcp.pop %v718
    %v723 = vrcp.pop %v721
    %v724 = vmul.f32 %v713, %v722
    %v725 = vmul.f32 %v715, %v723
    %v726 = vpack.c.bf16 %v725, %v724
    %v728 = vsel %vm413, %v726, 0
    %730 = vmatpush.bf16.msra.mxu0 0
    %731 = vmatpush.bf16.msra.mxu0 0
    %732 = vmatpush.bf16.msra.mxu0 0
    %733 = vmatpush.bf16.msra.mxu0 0
    %734 = vmatpush.bf16.msra.mxu0 0
    %735 = vmatpush.bf16.msra.mxu0 0
    %736 = vmatpush.bf16.msra.mxu0 0
    %737 = vmatpush.bf16.msra.mxu0 %v327
    %738 = vmatmul.bf16.gmra.mxu0 %v728
    %v739 = vpop.f32.mrf.mxu0
    %v740 = vadd.f32 0.0, %v739
    %v741 = vpop.f32.mrf.mxu0
    %v742 = vadd.f32 0.0, %v741
    %743 = vdwg.mxu0
    %v744 = vpack.c.bf16 %v742, %v740
    %s745 = scalar_lea.vmem %s8, 8
    %v746 = vld [vmem:[%s745] sm:$0xf]
    %v748 = vsel %vm202, %v744, 0
    %v751 = vsel %vm206, %v746, 0
    %753 = vmatpush.bf16.msra.mxu0 0
    %754 = vmatpush.bf16.msra.mxu0 0
    %755 = vmatpush.bf16.msra.mxu0 0
    %756 = vmatpush.bf16.msra.mxu0 0
    %757 = vmatpush.bf16.msra.mxu0 0
    %758 = vmatpush.bf16.msra.mxu0 0
    %759 = vmatpush.bf16.msra.mxu0 0
    %760 = vmatpush.bf16.msra.mxu0 %v751
    %761 = vmatmul.bf16.gmra.mxu0 %v748
    %v762 = vpop.f32.mrf.mxu0
    %v763 = vadd.f32 0.0, %v762
    %v764 = vpop.f32.mrf.mxu0
    %v765 = vadd.f32 0.0, %v764
    %766 = vdwg.mxu0
    %v767 = vadd.f32 %v616, %v763
    %v768 = vadd.f32 %v618, %v765
    %s769 = scalar_lea.vmem %s5, 48
    %v770 = vld [vmem:[%s769] sm:$0xf]
    %v771 = vld [vmem:[%s769 + $0x4] sm:$0xf]
    %v772 = vld [vmem:[%s769 + $0x8] sm:$0xf]
    %v773 = vld [vmem:[%s769 + $0xc] sm:$0xf]
    %v778 = vunpack.c.l.b16 %v770
    %v779 = vunpack.c.l.b16 %v771
    %v780 = vunpack.c.l.b16 %v772
    %v781 = vunpack.c.l.b16 %v773
    %v782 = vpack.c.b16 %v779, %v778
    %v783 = vpack.c.b16 %v781, %v780
    %786 = vmatpush.bf16.msra.mxu0 0
    %787 = vmatpush.bf16.msra.mxu0 0
    %788 = vmatpush.bf16.msra.mxu0 0
    %789 = vmatpush.bf16.msra.mxu0 0
    %790 = vmatpush.bf16.msra.mxu0 0
    %791 = vmatpush.bf16.msra.mxu0 0
    %792 = vmatpush.bf16.msra.mxu0 %v783
    %793 = vmatpush.bf16.msra.mxu0 %v782
    %794 = vmatmul.bf16.gmra.mxu0 %v147
    %v795 = vpop.f32.mrf.mxu0
    %v796 = vadd.f32 0.0, %v795
    %v797 = vpop.f32.mrf.mxu0
    %v798 = vadd.f32 0.0, %v797
    %799 = vdwg.mxu0
    %v800 = vmax.f32 %v796, -8.0
    %v801 = vmax.f32 %v798, -8.0
    %v802 = vmin.f32 %v800, 8.0
    %v803 = vmin.f32 %v801, 8.0
    %v804 = vpack.c.bf16 %v803, %v802
    %v806 = vsel %vm202, %v804, 0
    %808 = vmatpush.bf16.msra.mxu0 0
    %809 = vmatpush.bf16.msra.mxu0 0
    %810 = vmatpush.bf16.msra.mxu0 0
    %811 = vmatpush.bf16.msra.mxu0 0
    %812 = vmatpush.bf16.msra.mxu0 0
    %813 = vmatpush.bf16.msra.mxu0 0
    %814 = vmatpush.bf16.msra.mxu0 0
    %815 = vmatpush.bf16.msra.mxu0 %v208
    %816 = vmatmul.bf16.gmra.mxu0 %v806
    %v817 = vpop.f32.mrf.mxu0
    %v818 = vadd.f32 0.0, %v817
    %v819 = vpop.f32.mrf.mxu0
    %v820 = vadd.f32 0.0, %v819
    %821 = vdwg.mxu0
    %v822 = vmul.f32 %v802, %v125
    %v823 = vmul.f32 %v803, %v126
    %v824 = vmul.f32 %v818, %v127
    %v825 = vmul.f32 %v820, %v128
    %v826 = vadd.f32 %v822, %v824
    %v827 = vadd.f32 %v823, %v825
    %v828 = vpack.c.bf16 %v827, %v826
    %v830 = vsel %vm202, %v828, 0
    %832 = vmatpush.bf16.xpose.msra.mxu0 0
    %833 = vmatpush.bf16.xpose.msra.mxu0 0
    %834 = vmatpush.bf16.xpose.msra.mxu0 0
    %835 = vmatpush.bf16.xpose.msra.mxu0 0
    %836 = vmatpush.bf16.xpose.msra.mxu0 0
    %837 = vmatpush.bf16.xpose.msra.mxu0 0
    %838 = vmatpush.bf16.xpose.msra.mxu0 0
    %839 = vmatpush.bf16.xpose.msra.mxu0 %v684
    %840 = vmatmul.bf16.gmra.mxu0 %v830
    %v841 = vpop.f32.mrf.mxu0
    %v842 = vadd.f32 0.0, %v841
    %v843 = vpop.f32.mrf.mxu0
    %v844 = vadd.f32 0.0, %v843
    %845 = vdwg.mxu0
    %v846 = vmul.f32 %v842, 0.35355338
    %v847 = vmul.f32 %v844, 0.35355338
    %v848 = vadd.f32 %v846, %v328
    %v849 = vadd.f32 %v847, %v329
    %v850 = vsel %vm413, %v848, -inf
    %851 = vmax.xlane.f32.xlu0 %v850
    %v852 = vpop.xlane.xlu0 %851
    %v853 = vsel %vm413, %v849, -inf
    %854 = vmax.xlane.f32.xlu0 %v853
    %v855 = vpop.xlane.xlu0 %854
    %v856 = vsub.f32 %v848, %v852
    %v857 = vsub.f32 %v849, %v855
    %v858 = vmul.f32 %v856, 1.442695
    %v859 = vpow.pop %v858
    %v860 = vmul.f32 %v857, 1.442695
    %v861 = vpow.pop %v860
    %v862 = vsel %vm413, %v859, 0.0
    %863 = vadd.xlane.f32.xlu0 %v862
    %v864 = vpop.xlane.xlu0 %863
    %v865 = vsel %vm413, %v861, 0.0
    %866 = vadd.xlane.f32.xlu0 %v865
    %v867 = vpop.xlane.xlu0 %866
    %v868 = vrcp.pop %v864
    %v869 = vrcp.pop %v867
    %v870 = vmul.f32 %v859, %v868
    %v871 = vmul.f32 %v861, %v869
    %v872 = vpack.c.bf16 %v871, %v870
    %v874 = vsel %vm413, %v872, 0
    %876 = vmatpush.bf16.msra.mxu0 0
    %877 = vmatpush.bf16.msra.mxu0 0
    %878 = vmatpush.bf16.msra.mxu0 0
    %879 = vmatpush.bf16.msra.mxu0 0
    %880 = vmatpush.bf16.msra.mxu0 0
    %881 = vmatpush.bf16.msra.mxu0 0
    %882 = vmatpush.bf16.msra.mxu0 0
    %883 = vmatpush.bf16.msra.mxu0 %v327
    %884 = vmatmul.bf16.gmra.mxu0 %v874
    %v885 = vpop.f32.mrf.mxu0
    %v886 = vadd.f32 0.0, %v885
    %v887 = vpop.f32.mrf.mxu0
    %v888 = vadd.f32 0.0, %v887
    %889 = vdwg.mxu0
    %v890 = vpack.c.bf16 %v888, %v886
    %s891 = scalar_lea.vmem %s8, 12
    %v892 = vld [vmem:[%s891] sm:$0xf]
    %v894 = vsel %vm202, %v890, 0
    %v897 = vsel %vm206, %v892, 0
    %899 = vmatpush.bf16.msra.mxu0 0
    %900 = vmatpush.bf16.msra.mxu0 0
    %901 = vmatpush.bf16.msra.mxu0 0
    %902 = vmatpush.bf16.msra.mxu0 0
    %903 = vmatpush.bf16.msra.mxu0 0
    %904 = vmatpush.bf16.msra.mxu0 0
    %905 = vmatpush.bf16.msra.mxu0 0
    %906 = vmatpush.bf16.msra.mxu0 %v897
    %907 = vmatmul.bf16.gmra.mxu0 %v894
    %v908 = vpop.f32.mrf.mxu0
    %v909 = vadd.f32 0.0, %v908
    %v910 = vpop.f32.mrf.mxu0
    %v911 = vadd.f32 0.0, %v910
    %912 = vdwg.mxu0
    %v913 = vadd.f32 %v767, %v909
    %v914 = vadd.f32 %v768, %v911
    %v915 = vadd.f32 %v58, %v913
    %v916 = vadd.f32 %v59, %v914
    %v917 = vld [vmem:[%s3] sm:$0x1]
    %v918 = vld [vmem:[%s4] sm:$0x1]
    %v919 = vsel %vm62, %v915, 0.0
    %920 = vadd.xlane.f32.xlu0 %v919
    %v921 = vpop.xlane.xlu0 %920
    %v922 = vsel %vm62, %v916, 0.0
    %923 = vadd.xlane.f32.xlu0 %v922
    %v924 = vpop.xlane.xlu0 %923
    %v925 = vmul.f32 %v921, %v75
    %v926 = vmul.f32 %v924, %v75
    %v927 = vsub.f32 %v915, %v925
    %v928 = vsub.f32 %v916, %v926
    %v929 = vmul.f32 %v927, %v927
    %v930 = vmul.f32 %v928, %v928
    %v931 = vsel %vm62, %v929, 0.0
    %932 = vadd.xlane.f32.xlu0 %v931
    %v933 = vpop.xlane.xlu0 %932
    %v934 = vsel %vm62, %v930, 0.0
    %935 = vadd.xlane.f32.xlu0 %v934
    %v936 = vpop.xlane.xlu0 %935
    %v937 = vmul.f32 %v933, %v75
    %v938 = vmul.f32 %v936, %v75
    %v939 = vadd.f32 %v937, 1e-05
    %v940 = vadd.f32 %v938, 1e-05
    %v941 = vrsqrt.pop %v939
    %v942 = vmul.f32 %v941, %v939
    %v943 = vmul.f32 %v942, %v941
    %v944 = vmul.f32 0.5, %v943
    %v945 = vsub.f32 1.5, %v944
    %v946 = vmul.f32 %v941, %v945
    %vm947 = vweird.f32 %v939
    %vm948 = vweird.f32 %v941
    %vm949 = vmor %vm947, %vm948
    %v950 = vsel %vm949, %v941, %v946
    %v951 = vrsqrt.pop %v940
    %v952 = vmul.f32 %v951, %v940
    %v953 = vmul.f32 %v952, %v951
    %v954 = vmul.f32 0.5, %v953
    %v955 = vsub.f32 1.5, %v954
    %v956 = vmul.f32 %v951, %v955
    %vm957 = vweird.f32 %v940
    %vm958 = vweird.f32 %v951
    %vm959 = vmor %vm957, %vm958
    %v960 = vsel %vm959, %v951, %v956
    %v961 = vmul.f32 %v927, %v950
    %v962 = vmul.f32 %v928, %v960
    %v964 = vperm.slane %v917, 0
    %v966 = vmul.f32 %v961, %v964
    %v967 = vmul.f32 %v962, %v964
    %v969 = vperm.slane %v918, 0
    %v971 = vadd.f32 %v966, %v969
    %v972 = vadd.f32 %v967, %v969
    %v973 = vpack.c.bf16 %v972, %v971
    %v974 = vld [vmem:[%s9] sm:$0xf]
    %v975 = vld [vmem:[%s9 + $0x4] sm:$0xf]
    %v976 = vld [vmem:[%s9 + $0x8] sm:$0xf]
    %v977 = vld [vmem:[%s9 + $0xc] sm:$0xf]
    %v982 = vunpack.c.l.b16 %v974
    %v983 = vunpack.c.l.b16 %v975
    %v984 = vunpack.c.l.b16 %v976
    %v985 = vunpack.c.l.b16 %v977
    %v986 = vpack.c.b16 %v983, %v982
    %v987 = vpack.c.b16 %v985, %v984
    %v991 = vsel %vm62, %v973, 0
    %993 = vmatpush.bf16.msra.mxu0 0
    %994 = vmatpush.bf16.msra.mxu0 0
    %995 = vmatpush.bf16.msra.mxu0 0
    %996 = vmatpush.bf16.msra.mxu0 0
    %997 = vmatpush.bf16.msra.mxu0 0
    %998 = vmatpush.bf16.msra.mxu0 0
    %999 = vmatpush.bf16.msra.mxu0 %v987
    %1000 = vmatpush.bf16.msra.mxu0 %v986
    %1001 = vmatmul.bf16.gmra.mxu0 %v991
    %v1002 = vpop.f32.mrf.mxu0
    %v1003 = vadd.f32 0.0, %v1002
    %v1004 = vpop.f32.mrf.mxu0
    %v1005 = vadd.f32 0.0, %v1004
    %1006 = vdwg.mxu0
    %vm1007 = vcmask 31744
    %v1008 = vsel %vm1007, %v1003, -inf
    %1009 = vmax.xlane.f32.xlu0 %v1008
    %v1010 = vpop.xlane.xlu0 %1009
    %v1011 = vsel %vm1007, %v1005, -inf
    %1012 = vmax.xlane.f32.xlu0 %v1011
    %v1013 = vpop.xlane.xlu0 %1012
    %v1014 = vsub.f32 %v1003, %v1010
    %v1015 = vsub.f32 %v1005, %v1013
    %v1016 = vmul.f32 %v1014, 1.442695
    %v1017 = vpow.pop %v1016
    %v1018 = vmul.f32 %v1015, 1.442695
    %v1019 = vpow.pop %v1018
    %v1020 = vsel %vm1007, %v1017, 0.0
    %1021 = vadd.xlane.f32.xlu0 %v1020
    %v1022 = vpop.xlane.xlu0 %1021
    %v1023 = vsel %vm1007, %v1019, 0.0
    %1024 = vadd.xlane.f32.xlu0 %v1023
    %v1025 = vpop.xlane.xlu0 %1024
    %v1026 = vrcp.pop %v1022
    %v1027 = vrcp.pop %v1025
    %v1028 = vmul.f32 %v1017, %v1026
    %v1029 = vmul.f32 %v1019, %v1027
    %v1030 = vlaneseq
    %v1031 = vand.u32 %v1030, 127
    %v1032 = vcvt.s32.f32 %v1031
    %v1033 = vsel %vm1007, %v1028, -inf
    %1034 = vmax.xlane.f32.xlu0 %v1033
    %v1035 = vpop.xlane.xlu0 %1034
    %v1036 = vsel %vm1007, %v1029, -inf
    %1037 = vmax.xlane.f32.xlu0 %v1036
    %v1038 = vpop.xlane.xlu0 %1037
    %vm1039 = vcmp.ge.f32.partialorder %v1028, %v1035
    %vm1040 = vcmp.ge.f32.partialorder %v1029, %v1038
    %v1041 = vsel %vm1039, %v1032, 4.0
    %v1042 = vsel %vm1040, %v1032, 4.0
    %v1043 = vsel %vm1007, %v1041, inf
    %1044 = vmin.xlane.f32.xlu0 %v1043
    %v1045 = vpop.xlane.xlu0 %1044
    %v1046 = vsel %vm1007, %v1042, inf
    %1047 = vmin.xlane.f32.xlu0 %v1046
    %v1048 = vpop.xlane.xlu0 %1047
    %vm1049 = vcmp.eq.f32.partialorder %v1032, %v1045
    %vm1050 = vcmp.eq.f32.partialorder %v1032, %v1048
    %v1051 = vsel %vm1049, %v1035, 0.0
    %v1052 = vsel %vm1050, %v1038, 0.0
    %v1053 = vadd.f32 %v1051, 0.0
    %v1054 = vadd.f32 %v1052, 0.0
    %v1055 = vadd.f32 %v1035, 0.0
    %v1056 = vadd.f32 %v1038, 0.0
    %v1057 = vsel %vm1049, -1.0, %v1028
    %v1058 = vsel %vm1050, -1.0, %v1029
    %v1059 = vsel %vm1007, %v1057, -inf
    %1060 = vmax.xlane.f32.xlu0 %v1059
    %v1061 = vpop.xlane.xlu0 %1060
    %v1062 = vsel %vm1007, %v1058, -inf
    %1063 = vmax.xlane.f32.xlu0 %v1062
    %v1064 = vpop.xlane.xlu0 %1063
    %vm1065 = vcmp.ge.f32.partialorder %v1057, %v1061
    %vm1066 = vcmp.ge.f32.partialorder %v1058, %v1064
    %v1067 = vsel %vm1065, %v1032, 4.0
    %v1068 = vsel %vm1066, %v1032, 4.0
    %v1069 = vsel %vm1007, %v1067, inf
    %1070 = vmin.xlane.f32.xlu0 %v1069
    %v1071 = vpop.xlane.xlu0 %1070
    %v1072 = vsel %vm1007, %v1068, inf
    %1073 = vmin.xlane.f32.xlu0 %v1072
    %v1074 = vpop.xlane.xlu0 %1073
    %vm1075 = vcmp.eq.f32.partialorder %v1032, %v1071
    %vm1076 = vcmp.eq.f32.partialorder %v1032, %v1074
    %v1077 = vsel %vm1075, %v1061, 0.0
    %v1078 = vsel %vm1076, %v1064, 0.0
    %v1079 = vadd.f32 %v1053, %v1077
    %v1080 = vadd.f32 %v1054, %v1078
    %v1081 = vadd.f32 %v1055, %v1061
    %v1082 = vadd.f32 %v1056, %v1064
    %v1083 = vrcp.pop %v1081
    %v1084 = vrcp.pop %v1082
    %vm1085 = vcmp.eq.f32.partialorder %v1032, 0.0
    %v1086 = vsel %vm1085, %v1079, 0.0
    %v1087 = vsel %vm1085, %v1080, 0.0
    %v1088 = vsel %vm1007, %v1086, 0.0
    %1089 = vadd.xlane.f32.xlu0 %v1088
    %v1090 = vpop.xlane.xlu0 %1089
    %v1091 = vsel %vm1007, %v1087, 0.0
    %1092 = vadd.xlane.f32.xlu0 %v1091
    %v1093 = vpop.xlane.xlu0 %1092
    %v1094 = vmul.f32 %v1090, %v1083
    %v1095 = vmul.f32 %v1093, %v1084
    %v1096 = vld [vmem:[%s10] sm:$0xf]
    %v1097 = vld [vmem:[%s10 + $0x4] sm:$0xf]
    %v1098 = vld [vmem:[%s10 + $0x8] sm:$0xf]
    %v1099 = vld [vmem:[%s10 + $0xc] sm:$0xf]
    %v1104 = vunpack.c.l.b16 %v1096
    %v1105 = vunpack.c.l.b16 %v1097
    %v1106 = vunpack.c.l.b16 %v1098
    %v1107 = vunpack.c.l.b16 %v1099
    %v1108 = vpack.c.b16 %v1105, %v1104
    %v1109 = vpack.c.b16 %v1107, %v1106
    %1112 = vmatpush.bf16.msra.mxu0 0
    %1113 = vmatpush.bf16.msra.mxu0 0
    %1114 = vmatpush.bf16.msra.mxu0 0
    %1115 = vmatpush.bf16.msra.mxu0 0
    %1116 = vmatpush.bf16.msra.mxu0 0
    %1117 = vmatpush.bf16.msra.mxu0 0
    %1118 = vmatpush.bf16.msra.mxu0 %v1109
    %1119 = vmatpush.bf16.msra.mxu0 %v1108
    %1120 = vmatmul.bf16.gmra.mxu0 %v991
    %v1121 = vpop.f32.mrf.mxu0
    %v1122 = vadd.f32 0.0, %v1121
    %v1123 = vpop.f32.mrf.mxu0
    %v1124 = vadd.f32 0.0, %v1123
    %1125 = vdwg.mxu0
    %v1126 = vld [vmem:[%s11] sm:$0xf]
    %v1127 = vld [vmem:[%s11 + $0x4] sm:$0xf]
    %v1128 = vld [vmem:[%s11 + $0x8] sm:$0xf]
    %v1129 = vld [vmem:[%s11 + $0xc] sm:$0xf]
    %v1134 = vunpack.c.l.b16 %v1126
    %v1135 = vunpack.c.l.b16 %v1127
    %v1136 = vunpack.c.l.b16 %v1128
    %v1137 = vunpack.c.l.b16 %v1129
    %v1138 = vpack.c.b16 %v1135, %v1134
    %v1139 = vpack.c.b16 %v1137, %v1136
    %1142 = vmatpush.bf16.msra.mxu0 0
    %1143 = vmatpush.bf16.msra.mxu0 0
    %1144 = vmatpush.bf16.msra.mxu0 0
    %1145 = vmatpush.bf16.msra.mxu0 0
    %1146 = vmatpush.bf16.msra.mxu0 0
    %1147 = vmatpush.bf16.msra.mxu0 0
    %1148 = vmatpush.bf16.msra.mxu0 %v1139
    %1149 = vmatpush.bf16.msra.mxu0 %v1138
    %1150 = vmatmul.bf16.gmra.mxu0 %v991
    %v1151 = vpop.f32.mrf.mxu0
    %v1152 = vadd.f32 0.0, %v1151
    %v1153 = vpop.f32.mrf.mxu0
    %v1154 = vadd.f32 0.0, %v1153
    %1155 = vdwg.mxu0
    %v1156 = vxor.u32 %v1122, 2147483648
    %v1157 = vxor.u32 %v1124, 2147483648
    %v1158 = vmul.f32 %v1156, 1.442695
    %v1159 = vpow.pop %v1158
    %v1160 = vmul.f32 %v1157, 1.442695
    %v1161 = vpow.pop %v1160
    %v1162 = vadd.f32 %v1159, 1.0
    %v1163 = vadd.f32 %v1161, 1.0
    %v1164 = vrcp.pop %v1162
    %v1165 = vmul.f32 %v1162, %v1164
    %v1166 = vsub.f32 1.0, %v1165
    %v1167 = vmul.f32 %v1164, %v1166
    %v1168 = vadd.f32 %v1164, %v1167
    %vm1169 = vweird.f32 %v1162
    %vm1170 = vweird.f32 %v1164
    %vm1171 = vmor %vm1169, %vm1170
    %v1172 = vsel %vm1171, %v1164, %v1168
    %v1173 = vand.u32 2147483647, %v1162
    %vm1174 = vcmp.eq.f32.partialorder %v1173, 8.507059e+37
    %v1175 = vand.u32 %v1162, 2147483648
    %v1176 = vor.u32 1.1754944e-38, %v1175
    %v1177 = vsel %vm1174, %v1176, %v1172
    %v1178 = vmul.f32 1.0, %v1177
    %v1179 = vrcp.pop %v1163
    %v1180 = vmul.f32 %v1163, %v1179
    %v1181 = vsub.f32 1.0, %v1180
    %v1182 = vmul.f32 %v1179, %v1181
    %v1183 = vadd.f32 %v1179, %v1182
    %vm1184 = vweird.f32 %v1163
    %vm1185 = vweird.f32 %v1179
    %vm1186 = vmor %vm1184, %vm1185
    %v1187 = vsel %vm1186, %v1179, %v1183
    %v1188 = vand.u32 2147483647, %v1163
    %vm1189 = vcmp.eq.f32.partialorder %v1188, 8.507059e+37
    %v1190 = vand.u32 %v1163, 2147483648
    %v1191 = vor.u32 1.1754944e-38, %v1190
    %v1192 = vsel %vm1189, %v1191, %v1187
    %v1193 = vmul.f32 1.0, %v1192
    %v1194 = vmul.f32 %v1122, %v1178
    %v1195 = vmul.f32 %v1124, %v1193
    %v1196 = vmul.f32 %v1194, %v1152
    %v1197 = vmul.f32 %v1195, %v1154
    %v1198 = vpack.c.bf16 %v1197, %v1196
    %v1199 = vld [vmem:[%s12] sm:$0xf]
    %v1200 = vld [vmem:[%s12 + $0x4] sm:$0xf]
    %v1201 = vld [vmem:[%s12 + $0x8] sm:$0xf]
    %v1202 = vld [vmem:[%s12 + $0xc] sm:$0xf]
    %v1203 = vld [vmem:[%s12 + $0x10] sm:$0xf]
    %v1204 = vld [vmem:[%s12 + $0x14] sm:$0xf]
    %v1205 = vld [vmem:[%s12 + $0x18] sm:$0xf]
    %v1206 = vld [vmem:[%s12 + $0x1c] sm:$0xf]
    %v1215 = vunpack.c.l.b16 %v1199
    %v1216 = vunpack.c.l.b16 %v1200
    %v1217 = vunpack.c.l.b16 %v1201
    %v1218 = vunpack.c.l.b16 %v1202
    %v1219 = vunpack.c.l.b16 %v1203
    %v1220 = vunpack.c.l.b16 %v1204
    %v1221 = vunpack.c.l.b16 %v1205
    %v1222 = vunpack.c.l.b16 %v1206
    %v1223 = vpack.c.b16 %v1216, %v1215
    %v1224 = vpack.c.b16 %v1218, %v1217
    %v1225 = vpack.c.b16 %v1220, %v1219
    %v1226 = vpack.c.b16 %v1222, %v1221
    %vm1231 = vcmask 523264
    %v1233 = vsel %vm1231, %v1198, 0
    %1235 = vmatpush.bf16.msra.mxu0 0
    %1236 = vmatpush.bf16.msra.mxu0 0
    %1237 = vmatpush.bf16.msra.mxu0 0
    %1238 = vmatpush.bf16.msra.mxu0 0
    %1239 = vmatpush.bf16.msra.mxu0 %v1226
    %1240 = vmatpush.bf16.msra.mxu0 %v1225
    %1241 = vmatpush.bf16.msra.mxu0 %v1224
    %1242 = vmatpush.bf16.msra.mxu0 %v1223
    %1243 = vmatmul.bf16.gmra.mxu0 %v1233
    %v1244 = vpop.f32.mrf.mxu0
    %v1245 = vadd.f32 0.0, %v1244
    %v1246 = vpop.f32.mrf.mxu0
    %v1247 = vadd.f32 0.0, %v1246
    %1248 = vdwg.mxu0
    %v1249 = vmul.f32 %v1094, %v1245
    %v1250 = vmul.f32 %v1095, %v1247
    %v1251 = vadd.f32 %v1249, 0.0
    %v1252 = vadd.f32 %v1250, 0.0
    %vm1253 = vcmp.eq.f32.partialorder %v1032, 1.0
    %v1254 = vsel %vm1253, %v1079, 0.0
    %v1255 = vsel %vm1253, %v1080, 0.0
    %v1256 = vsel %vm1007, %v1254, 0.0
    %1257 = vadd.xlane.f32.xlu0 %v1256
    %v1258 = vpop.xlane.xlu0 %1257
    %v1259 = vsel %vm1007, %v1255, 0.0
    %1260 = vadd.xlane.f32.xlu0 %v1259
    %v1261 = vpop.xlane.xlu0 %1260
    %v1262 = vmul.f32 %v1258, %v1083
    %v1263 = vmul.f32 %v1261, %v1084
    %s1264 = scalar_lea.vmem %s10, 16
    %v1265 = vld [vmem:[%s1264] sm:$0xf]
    %v1266 = vld [vmem:[%s1264 + $0x4] sm:$0xf]
    %v1267 = vld [vmem:[%s1264 + $0x8] sm:$0xf]
    %v1268 = vld [vmem:[%s1264 + $0xc] sm:$0xf]
    %v1273 = vunpack.c.l.b16 %v1265
    %v1274 = vunpack.c.l.b16 %v1266
    %v1275 = vunpack.c.l.b16 %v1267
    %v1276 = vunpack.c.l.b16 %v1268
    %v1277 = vpack.c.b16 %v1274, %v1273
    %v1278 = vpack.c.b16 %v1276, %v1275
    %1281 = vmatpush.bf16.msra.mxu0 0
    %1282 = vmatpush.bf16.msra.mxu0 0
    %1283 = vmatpush.bf16.msra.mxu0 0
    %1284 = vmatpush.bf16.msra.mxu0 0
    %1285 = vmatpush.bf16.msra.mxu0 0
    %1286 = vmatpush.bf16.msra.mxu0 0
    %1287 = vmatpush.bf16.msra.mxu0 %v1278
    %1288 = vmatpush.bf16.msra.mxu0 %v1277
    %1289 = vmatmul.bf16.gmra.mxu0 %v991
    %v1290 = vpop.f32.mrf.mxu0
    %v1291 = vadd.f32 0.0, %v1290
    %v1292 = vpop.f32.mrf.mxu0
    %v1293 = vadd.f32 0.0, %v1292
    %1294 = vdwg.mxu0
    %s1295 = scalar_lea.vmem %s11, 16
    %v1296 = vld [vmem:[%s1295] sm:$0xf]
    %v1297 = vld [vmem:[%s1295 + $0x4] sm:$0xf]
    %v1298 = vld [vmem:[%s1295 + $0x8] sm:$0xf]
    %v1299 = vld [vmem:[%s1295 + $0xc] sm:$0xf]
    %v1304 = vunpack.c.l.b16 %v1296
    %v1305 = vunpack.c.l.b16 %v1297
    %v1306 = vunpack.c.l.b16 %v1298
    %v1307 = vunpack.c.l.b16 %v1299
    %v1308 = vpack.c.b16 %v1305, %v1304
    %v1309 = vpack.c.b16 %v1307, %v1306
    %1312 = vmatpush.bf16.msra.mxu0 0
    %1313 = vmatpush.bf16.msra.mxu0 0
    %1314 = vmatpush.bf16.msra.mxu0 0
    %1315 = vmatpush.bf16.msra.mxu0 0
    %1316 = vmatpush.bf16.msra.mxu0 0
    %1317 = vmatpush.bf16.msra.mxu0 0
    %1318 = vmatpush.bf16.msra.mxu0 %v1309
    %1319 = vmatpush.bf16.msra.mxu0 %v1308
    %1320 = vmatmul.bf16.gmra.mxu0 %v991
    %v1321 = vpop.f32.mrf.mxu0
    %v1322 = vadd.f32 0.0, %v1321
    %v1323 = vpop.f32.mrf.mxu0
    %v1324 = vadd.f32 0.0, %v1323
    %1325 = vdwg.mxu0
    %v1326 = vxor.u32 %v1291, 2147483648
    %v1327 = vxor.u32 %v1293, 2147483648
    %v1328 = vmul.f32 %v1326, 1.442695
    %v1329 = vpow.pop %v1328
    %v1330 = vmul.f32 %v1327, 1.442695
    %v1331 = vpow.pop %v1330
    %v1332 = vadd.f32 %v1329, 1.0
    %v1333 = vadd.f32 %v1331, 1.0
    %v1334 = vrcp.pop %v1332
    %v1335 = vmul.f32 %v1332, %v1334
    %v1336 = vsub.f32 1.0, %v1335
    %v1337 = vmul.f32 %v1334, %v1336
    %v1338 = vadd.f32 %v1334, %v1337
    %vm1339 = vweird.f32 %v1332
    %vm1340 = vweird.f32 %v1334
    %vm1341 = vmor %vm1339, %vm1340
    %v1342 = vsel %vm1341, %v1334, %v1338
    %v1343 = vand.u32 2147483647, %v1332
    %vm1344 = vcmp.eq.f32.partialorder %v1343, 8.507059e+37
    %v1345 = vand.u32 %v1332, 2147483648
    %v1346 = vor.u32 1.1754944e-38, %v1345
    %v1347 = vsel %vm1344, %v1346, %v1342
    %v1348 = vmul.f32 1.0, %v1347
    %v1349 = vrcp.pop %v1333
    %v1350 = vmul.f32 %v1333, %v1349
    %v1351 = vsub.f32 1.0, %v1350
    %v1352 = vmul.f32 %v1349, %v1351
    %v1353 = vadd.f32 %v1349, %v1352
    %vm1354 = vweird.f32 %v1333
    %vm1355 = vweird.f32 %v1349
    %vm1356 = vmor %vm1354, %vm1355
    %v1357 = vsel %vm1356, %v1349, %v1353
    %v1358 = vand.u32 2147483647, %v1333
    %vm1359 = vcmp.eq.f32.partialorder %v1358, 8.507059e+37
    %v1360 = vand.u32 %v1333, 2147483648
    %v1361 = vor.u32 1.1754944e-38, %v1360
    %v1362 = vsel %vm1359, %v1361, %v1357
    %v1363 = vmul.f32 1.0, %v1362
    %v1364 = vmul.f32 %v1291, %v1348
    %v1365 = vmul.f32 %v1293, %v1363
    %v1366 = vmul.f32 %v1364, %v1322
    %v1367 = vmul.f32 %v1365, %v1324
    %v1368 = vpack.c.bf16 %v1367, %v1366
    %s1369 = scalar_lea.vmem %s12, 32
    %v1370 = vld [vmem:[%s1369] sm:$0xf]
    %v1371 = vld [vmem:[%s1369 + $0x4] sm:$0xf]
    %v1372 = vld [vmem:[%s1369 + $0x8] sm:$0xf]
    %v1373 = vld [vmem:[%s1369 + $0xc] sm:$0xf]
    %v1374 = vld [vmem:[%s1369 + $0x10] sm:$0xf]
    %v1375 = vld [vmem:[%s1369 + $0x14] sm:$0xf]
    %v1376 = vld [vmem:[%s1369 + $0x18] sm:$0xf]
    %v1377 = vld [vmem:[%s1369 + $0x1c] sm:$0xf]
    %v1386 = vunpack.c.l.b16 %v1370
    %v1387 = vunpack.c.l.b16 %v1371
    %v1388 = vunpack.c.l.b16 %v1372
    %v1389 = vunpack.c.l.b16 %v1373
    %v1390 = vunpack.c.l.b16 %v1374
    %v1391 = vunpack.c.l.b16 %v1375
    %v1392 = vunpack.c.l.b16 %v1376
    %v1393 = vunpack.c.l.b16 %v1377
    %v1394 = vpack.c.b16 %v1387, %v1386
    %v1395 = vpack.c.b16 %v1389, %v1388
    %v1396 = vpack.c.b16 %v1391, %v1390
    %v1397 = vpack.c.b16 %v1393, %v1392
    %v1403 = vsel %vm1231, %v1368, 0
    %1405 = vmatpush.bf16.msra.mxu0 0
    %1406 = vmatpush.bf16.msra.mxu0 0
    %1407 = vmatpush.bf16.msra.mxu0 0
    %1408 = vmatpush.bf16.msra.mxu0 0
    %1409 = vmatpush.bf16.msra.mxu0 %v1397
    %1410 = vmatpush.bf16.msra.mxu0 %v1396
    %1411 = vmatpush.bf16.msra.mxu0 %v1395
    %1412 = vmatpush.bf16.msra.mxu0 %v1394
    %1413 = vmatmul.bf16.gmra.mxu0 %v1403
    %v1414 = vpop.f32.mrf.mxu0
    %v1415 = vadd.f32 0.0, %v1414
    %v1416 = vpop.f32.mrf.mxu0
    %v1417 = vadd.f32 0.0, %v1416
    %1418 = vdwg.mxu0
    %v1419 = vmul.f32 %v1262, %v1415
    %v1420 = vmul.f32 %v1263, %v1417
    %v1421 = vadd.f32 %v1251, %v1419
    %v1422 = vadd.f32 %v1252, %v1420
    %vm1423 = vcmp.eq.f32.partialorder %v1032, 2.0
    %v1424 = vsel %vm1423, %v1079, 0.0
    %v1425 = vsel %vm1423, %v1080, 0.0
    %v1426 = vsel %vm1007, %v1424, 0.0
    %1427 = vadd.xlane.f32.xlu0 %v1426
    %v1428 = vpop.xlane.xlu0 %1427
    %v1429 = vsel %vm1007, %v1425, 0.0
    %1430 = vadd.xlane.f32.xlu0 %v1429
    %v1431 = vpop.xlane.xlu0 %1430
    %v1432 = vmul.f32 %v1428, %v1083
    %v1433 = vmul.f32 %v1431, %v1084
    %s1434 = scalar_lea.vmem %s10, 32
    %v1435 = vld [vmem:[%s1434] sm:$0xf]
    %v1436 = vld [vmem:[%s1434 + $0x4] sm:$0xf]
    %v1437 = vld [vmem:[%s1434 + $0x8] sm:$0xf]
    %v1438 = vld [vmem:[%s1434 + $0xc] sm:$0xf]
    %v1443 = vunpack.c.l.b16 %v1435
    %v1444 = vunpack.c.l.b16 %v1436
    %v1445 = vunpack.c.l.b16 %v1437
    %v1446 = vunpack.c.l.b16 %v1438
    %v1447 = vpack.c.b16 %v1444, %v1443
    %v1448 = vpack.c.b16 %v1446, %v1445
    %1451 = vmatpush.bf16.msra.mxu0 0
    %1452 = vmatpush.bf16.msra.mxu0 0
    %1453 = vmatpush.bf16.msra.mxu0 0
    %1454 = vmatpush.bf16.msra.mxu0 0
    %1455 = vmatpush.bf16.msra.mxu0 0
    %1456 = vmatpush.bf16.msra.mxu0 0
    %1457 = vmatpush.bf16.msra.mxu0 %v1448
    %1458 = vmatpush.bf16.msra.mxu0 %v1447
    %1459 = vmatmul.bf16.gmra.mxu0 %v991
    %v1460 = vpop.f32.mrf.mxu0
    %v1461 = vadd.f32 0.0, %v1460
    %v1462 = vpop.f32.mrf.mxu0
    %v1463 = vadd.f32 0.0, %v1462
    %1464 = vdwg.mxu0
    %s1465 = scalar_lea.vmem %s11, 32
    %v1466 = vld [vmem:[%s1465] sm:$0xf]
    %v1467 = vld [vmem:[%s1465 + $0x4] sm:$0xf]
    %v1468 = vld [vmem:[%s1465 + $0x8] sm:$0xf]
    %v1469 = vld [vmem:[%s1465 + $0xc] sm:$0xf]
    %v1474 = vunpack.c.l.b16 %v1466
    %v1475 = vunpack.c.l.b16 %v1467
    %v1476 = vunpack.c.l.b16 %v1468
    %v1477 = vunpack.c.l.b16 %v1469
    %v1478 = vpack.c.b16 %v1475, %v1474
    %v1479 = vpack.c.b16 %v1477, %v1476
    %1482 = vmatpush.bf16.msra.mxu0 0
    %1483 = vmatpush.bf16.msra.mxu0 0
    %1484 = vmatpush.bf16.msra.mxu0 0
    %1485 = vmatpush.bf16.msra.mxu0 0
    %1486 = vmatpush.bf16.msra.mxu0 0
    %1487 = vmatpush.bf16.msra.mxu0 0
    %1488 = vmatpush.bf16.msra.mxu0 %v1479
    %1489 = vmatpush.bf16.msra.mxu0 %v1478
    %1490 = vmatmul.bf16.gmra.mxu0 %v991
    %v1491 = vpop.f32.mrf.mxu0
    %v1492 = vadd.f32 0.0, %v1491
    %v1493 = vpop.f32.mrf.mxu0
    %v1494 = vadd.f32 0.0, %v1493
    %1495 = vdwg.mxu0
    %v1496 = vxor.u32 %v1461, 2147483648
    %v1497 = vxor.u32 %v1463, 2147483648
    %v1498 = vmul.f32 %v1496, 1.442695
    %v1499 = vpow.pop %v1498
    %v1500 = vmul.f32 %v1497, 1.442695
    %v1501 = vpow.pop %v1500
    %v1502 = vadd.f32 %v1499, 1.0
    %v1503 = vadd.f32 %v1501, 1.0
    %v1504 = vrcp.pop %v1502
    %v1505 = vmul.f32 %v1502, %v1504
    %v1506 = vsub.f32 1.0, %v1505
    %v1507 = vmul.f32 %v1504, %v1506
    %v1508 = vadd.f32 %v1504, %v1507
    %vm1509 = vweird.f32 %v1502
    %vm1510 = vweird.f32 %v1504
    %vm1511 = vmor %vm1509, %vm1510
    %v1512 = vsel %vm1511, %v1504, %v1508
    %v1513 = vand.u32 2147483647, %v1502
    %vm1514 = vcmp.eq.f32.partialorder %v1513, 8.507059e+37
    %v1515 = vand.u32 %v1502, 2147483648
    %v1516 = vor.u32 1.1754944e-38, %v1515
    %v1517 = vsel %vm1514, %v1516, %v1512
    %v1518 = vmul.f32 1.0, %v1517
    %v1519 = vrcp.pop %v1503
    %v1520 = vmul.f32 %v1503, %v1519
    %v1521 = vsub.f32 1.0, %v1520
    %v1522 = vmul.f32 %v1519, %v1521
    %v1523 = vadd.f32 %v1519, %v1522
    %vm1524 = vweird.f32 %v1503
    %vm1525 = vweird.f32 %v1519
    %vm1526 = vmor %vm1524, %vm1525
    %v1527 = vsel %vm1526, %v1519, %v1523
    %v1528 = vand.u32 2147483647, %v1503
    %vm1529 = vcmp.eq.f32.partialorder %v1528, 8.507059e+37
    %v1530 = vand.u32 %v1503, 2147483648
    %v1531 = vor.u32 1.1754944e-38, %v1530
    %v1532 = vsel %vm1529, %v1531, %v1527
    %v1533 = vmul.f32 1.0, %v1532
    %v1534 = vmul.f32 %v1461, %v1518
    %v1535 = vmul.f32 %v1463, %v1533
    %v1536 = vmul.f32 %v1534, %v1492
    %v1537 = vmul.f32 %v1535, %v1494
    %v1538 = vpack.c.bf16 %v1537, %v1536
    %s1539 = scalar_lea.vmem %s12, 64
    %v1540 = vld [vmem:[%s1539] sm:$0xf]
    %v1541 = vld [vmem:[%s1539 + $0x4] sm:$0xf]
    %v1542 = vld [vmem:[%s1539 + $0x8] sm:$0xf]
    %v1543 = vld [vmem:[%s1539 + $0xc] sm:$0xf]
    %v1544 = vld [vmem:[%s1539 + $0x10] sm:$0xf]
    %v1545 = vld [vmem:[%s1539 + $0x14] sm:$0xf]
    %v1546 = vld [vmem:[%s1539 + $0x18] sm:$0xf]
    %v1547 = vld [vmem:[%s1539 + $0x1c] sm:$0xf]
    %v1556 = vunpack.c.l.b16 %v1540
    %v1557 = vunpack.c.l.b16 %v1541
    %v1558 = vunpack.c.l.b16 %v1542
    %v1559 = vunpack.c.l.b16 %v1543
    %v1560 = vunpack.c.l.b16 %v1544
    %v1561 = vunpack.c.l.b16 %v1545
    %v1562 = vunpack.c.l.b16 %v1546
    %v1563 = vunpack.c.l.b16 %v1547
    %v1564 = vpack.c.b16 %v1557, %v1556
    %v1565 = vpack.c.b16 %v1559, %v1558
    %v1566 = vpack.c.b16 %v1561, %v1560
    %v1567 = vpack.c.b16 %v1563, %v1562
    %v1573 = vsel %vm1231, %v1538, 0
    %1575 = vmatpush.bf16.msra.mxu0 0
    %1576 = vmatpush.bf16.msra.mxu0 0
    %1577 = vmatpush.bf16.msra.mxu0 0
    %1578 = vmatpush.bf16.msra.mxu0 0
    %1579 = vmatpush.bf16.msra.mxu0 %v1567
    %1580 = vmatpush.bf16.msra.mxu0 %v1566
    %1581 = vmatpush.bf16.msra.mxu0 %v1565
    %1582 = vmatpush.bf16.msra.mxu0 %v1564
    %1583 = vmatmul.bf16.gmra.mxu0 %v1573
    %v1584 = vpop.f32.mrf.mxu0
    %v1585 = vadd.f32 0.0, %v1584
    %v1586 = vpop.f32.mrf.mxu0
    %v1587 = vadd.f32 0.0, %v1586
    %1588 = vdwg.mxu0
    %v1589 = vmul.f32 %v1432, %v1585
    %v1590 = vmul.f32 %v1433, %v1587
    %v1591 = vadd.f32 %v1421, %v1589
    %v1592 = vadd.f32 %v1422, %v1590
    %vm1593 = vcmp.eq.f32.partialorder %v1032, 3.0
    %v1594 = vsel %vm1593, %v1079, 0.0
    %v1595 = vsel %vm1593, %v1080, 0.0
    %v1596 = vsel %vm1007, %v1594, 0.0
    %1597 = vadd.xlane.f32.xlu0 %v1596
    %v1598 = vpop.xlane.xlu0 %1597
    %v1599 = vsel %vm1007, %v1595, 0.0
    %1600 = vadd.xlane.f32.xlu0 %v1599
    %v1601 = vpop.xlane.xlu0 %1600
    %v1602 = vmul.f32 %v1598, %v1083
    %v1603 = vmul.f32 %v1601, %v1084
    %s1604 = scalar_lea.vmem %s10, 48
    %v1605 = vld [vmem:[%s1604] sm:$0xf]
    %v1606 = vld [vmem:[%s1604 + $0x4] sm:$0xf]
    %v1607 = vld [vmem:[%s1604 + $0x8] sm:$0xf]
    %v1608 = vld [vmem:[%s1604 + $0xc] sm:$0xf]
    %v1613 = vunpack.c.l.b16 %v1605
    %v1614 = vunpack.c.l.b16 %v1606
    %v1615 = vunpack.c.l.b16 %v1607
    %v1616 = vunpack.c.l.b16 %v1608
    %v1617 = vpack.c.b16 %v1614, %v1613
    %v1618 = vpack.c.b16 %v1616, %v1615
    %1621 = vmatpush.bf16.msra.mxu0 0
    %1622 = vmatpush.bf16.msra.mxu0 0
    %1623 = vmatpush.bf16.msra.mxu0 0
    %1624 = vmatpush.bf16.msra.mxu0 0
    %1625 = vmatpush.bf16.msra.mxu0 0
    %1626 = vmatpush.bf16.msra.mxu0 0
    %1627 = vmatpush.bf16.msra.mxu0 %v1618
    %1628 = vmatpush.bf16.msra.mxu0 %v1617
    %1629 = vmatmul.bf16.gmra.mxu0 %v991
    %v1630 = vpop.f32.mrf.mxu0
    %v1631 = vadd.f32 0.0, %v1630
    %v1632 = vpop.f32.mrf.mxu0
    %v1633 = vadd.f32 0.0, %v1632
    %1634 = vdwg.mxu0
    %s1635 = scalar_lea.vmem %s11, 48
    %v1636 = vld [vmem:[%s1635] sm:$0xf]
    %v1637 = vld [vmem:[%s1635 + $0x4] sm:$0xf]
    %v1638 = vld [vmem:[%s1635 + $0x8] sm:$0xf]
    %v1639 = vld [vmem:[%s1635 + $0xc] sm:$0xf]
    %v1644 = vunpack.c.l.b16 %v1636
    %v1645 = vunpack.c.l.b16 %v1637
    %v1646 = vunpack.c.l.b16 %v1638
    %v1647 = vunpack.c.l.b16 %v1639
    %v1648 = vpack.c.b16 %v1645, %v1644
    %v1649 = vpack.c.b16 %v1647, %v1646
    %1652 = vmatpush.bf16.msra.mxu0 0
    %1653 = vmatpush.bf16.msra.mxu0 0
    %1654 = vmatpush.bf16.msra.mxu0 0
    %1655 = vmatpush.bf16.msra.mxu0 0
    %1656 = vmatpush.bf16.msra.mxu0 0
    %1657 = vmatpush.bf16.msra.mxu0 0
    %1658 = vmatpush.bf16.msra.mxu0 %v1649
    %1659 = vmatpush.bf16.msra.mxu0 %v1648
    %1660 = vmatmul.bf16.gmra.mxu0 %v991
    %v1661 = vpop.f32.mrf.mxu0
    %v1662 = vadd.f32 0.0, %v1661
    %v1663 = vpop.f32.mrf.mxu0
    %v1664 = vadd.f32 0.0, %v1663
    %1665 = vdwg.mxu0
    %v1666 = vxor.u32 %v1631, 2147483648
    %v1667 = vxor.u32 %v1633, 2147483648
    %v1668 = vmul.f32 %v1666, 1.442695
    %v1669 = vpow.pop %v1668
    %v1670 = vmul.f32 %v1667, 1.442695
    %v1671 = vpow.pop %v1670
    %v1672 = vadd.f32 %v1669, 1.0
    %v1673 = vadd.f32 %v1671, 1.0
    %v1674 = vrcp.pop %v1672
    %v1675 = vmul.f32 %v1672, %v1674
    %v1676 = vsub.f32 1.0, %v1675
    %v1677 = vmul.f32 %v1674, %v1676
    %v1678 = vadd.f32 %v1674, %v1677
    %vm1679 = vweird.f32 %v1672
    %vm1680 = vweird.f32 %v1674
    %vm1681 = vmor %vm1679, %vm1680
    %v1682 = vsel %vm1681, %v1674, %v1678
    %v1683 = vand.u32 2147483647, %v1672
    %vm1684 = vcmp.eq.f32.partialorder %v1683, 8.507059e+37
    %v1685 = vand.u32 %v1672, 2147483648
    %v1686 = vor.u32 1.1754944e-38, %v1685
    %v1687 = vsel %vm1684, %v1686, %v1682
    %v1688 = vmul.f32 1.0, %v1687
    %v1689 = vrcp.pop %v1673
    %v1690 = vmul.f32 %v1673, %v1689
    %v1691 = vsub.f32 1.0, %v1690
    %v1692 = vmul.f32 %v1689, %v1691
    %v1693 = vadd.f32 %v1689, %v1692
    %vm1694 = vweird.f32 %v1673
    %vm1695 = vweird.f32 %v1689
    %vm1696 = vmor %vm1694, %vm1695
    %v1697 = vsel %vm1696, %v1689, %v1693
    %v1698 = vand.u32 2147483647, %v1673
    %vm1699 = vcmp.eq.f32.partialorder %v1698, 8.507059e+37
    %v1700 = vand.u32 %v1673, 2147483648
    %v1701 = vor.u32 1.1754944e-38, %v1700
    %v1702 = vsel %vm1699, %v1701, %v1697
    %v1703 = vmul.f32 1.0, %v1702
    %v1704 = vmul.f32 %v1631, %v1688
    %v1705 = vmul.f32 %v1633, %v1703
    %v1706 = vmul.f32 %v1704, %v1662
    %v1707 = vmul.f32 %v1705, %v1664
    %v1708 = vpack.c.bf16 %v1707, %v1706
    %s1709 = scalar_lea.vmem %s12, 96
    %v1710 = vld [vmem:[%s1709] sm:$0xf]
    %v1711 = vld [vmem:[%s1709 + $0x4] sm:$0xf]
    %v1712 = vld [vmem:[%s1709 + $0x8] sm:$0xf]
    %v1713 = vld [vmem:[%s1709 + $0xc] sm:$0xf]
    %v1714 = vld [vmem:[%s1709 + $0x10] sm:$0xf]
    %v1715 = vld [vmem:[%s1709 + $0x14] sm:$0xf]
    %v1716 = vld [vmem:[%s1709 + $0x18] sm:$0xf]
    %v1717 = vld [vmem:[%s1709 + $0x1c] sm:$0xf]
    %v1726 = vunpack.c.l.b16 %v1710
    %v1727 = vunpack.c.l.b16 %v1711
    %v1728 = vunpack.c.l.b16 %v1712
    %v1729 = vunpack.c.l.b16 %v1713
    %v1730 = vunpack.c.l.b16 %v1714
    %v1731 = vunpack.c.l.b16 %v1715
    %v1732 = vunpack.c.l.b16 %v1716
    %v1733 = vunpack.c.l.b16 %v1717
    %v1734 = vpack.c.b16 %v1727, %v1726
    %v1735 = vpack.c.b16 %v1729, %v1728
    %v1736 = vpack.c.b16 %v1731, %v1730
    %v1737 = vpack.c.b16 %v1733, %v1732
    %v1743 = vsel %vm1231, %v1708, 0
    %1745 = vmatpush.bf16.msra.mxu0 0
    %1746 = vmatpush.bf16.msra.mxu0 0
    %1747 = vmatpush.bf16.msra.mxu0 0
    %1748 = vmatpush.bf16.msra.mxu0 0
    %1749 = vmatpush.bf16.msra.mxu0 %v1737
    %1750 = vmatpush.bf16.msra.mxu0 %v1736
    %1751 = vmatpush.bf16.msra.mxu0 %v1735
    %1752 = vmatpush.bf16.msra.mxu0 %v1734
    %1753 = vmatmul.bf16.gmra.mxu0 %v1743
    %v1754 = vpop.f32.mrf.mxu0
    %v1755 = vadd.f32 0.0, %v1754
    %v1756 = vpop.f32.mrf.mxu0
    %v1757 = vadd.f32 0.0, %v1756
    %1758 = vdwg.mxu0
    %v1759 = vmul.f32 %v1602, %v1755
    %v1760 = vmul.f32 %v1603, %v1757
    %v1761 = vadd.f32 %v1591, %v1759
    %v1762 = vadd.f32 %v1592, %v1760
    %v1763 = vadd.f32 %v915, %v1761
    %v1764 = vadd.f32 %v916, %v1762
    %1765 = vst.msk [vmem:[#allocation2] sm:$0xff] %vm62, %v1763
    %1766 = vst.msk [vmem:[#allocation2 + $0x8] sm:$0xff] %vm62, %v1764
    // Predicated region
    $region70: #{dbrx_block_forward.1} parent=1 // pred_check
      _
    $region71: #{dbrx_block_forward.1} parent=1 // pred_check_branch
      %1768 = sbr.rel (0) target = $region73
    $region72: #{dbrx_block_forward.1} parent=1 // pred_region
      %1770 = vsyncadd [#allocation3], 0
      %s1771 = sshll.u32 [#allocation2], 4
      %s1772 = int_to_ptr.vmem [resolvable:$true] %s1771
      %s1773 = sshll.u32 %s17, 4
      %s1774 = int_to_ptr.hbm [resolvable:$true] %s1773
      %1779 = dma.vmem_to_hbm [thread:$0]  %s1772, 256, %s1774, [#allocation3], 128, 128, 8
    $region73: #{dbrx_block_forward.1} parent=1 // pred_fallthru
      _
    // Predicated region
    $region74: #{dbrx_block_forward.1} parent=1 // pred_check
      _
    $region75: #{dbrx_block_forward.1} parent=1 // pred_check_branch
      %1781 = sbr.rel (0) target = $region77
    $region76: #{dbrx_block_forward.1} parent=1 // pred_region
      %1783 = dma.done [#allocation3], 256
    $region77: #{dbrx_block_forward.1} parent=1 // pred_fallthru
      _
    %1784 = vsyncpa [#allocation3], 1

</llo_original>
